<compile_context>
chip_gen: v7x
topology: tpu7x:2x2x1
jax: 0.10.0
libtpu: 0.0.40
codegen_flags: <defaults>
</compile_context>

<pallas_src>
import functools

import jax
import jax.numpy as jnp
from jax.experimental import pallas as pl
from jax.experimental.pallas import tpu as pltpu


def cross_encoder_kernel(hidden_ref, mask_ref, cnt_ref, w_ref, b_ref,   # inputs
                         scores_ref,                                     # output
                         acc_ref, *,                                     # VMEM scratch
                         temperature: float, use_sigmoid: bool):
    k = pl.program_id(1)

    # ---- per-row-block init of the pooling accumulator ----------------------
    @pl.when(k == 0)
    def _init():
        acc_ref[...] = jnp.zeros_like(acc_ref)

    # ---- masked-sum pooling for this sequence chunk (batched MXU, f32 acc) --
    # mask block: (RB, 1, TS) in hidden dtype, hidden block: (RB, TS, H)
    # -> per-row (1,TS)@(TS,H) contraction, accumulated in f32.
    acc_ref[...] += jnp.einsum(
        'rot,rth->roh', mask_ref[...], hidden_ref[...],
        preferred_element_type=jnp.float32)                  # (RB, 1, H)

    # ---- finalize: classifier head, mean-pool scale, CrossEncoder post-proc --
    @pl.when(k == pl.num_programs(1) - 1)
    def _finalize():
        pooled_sum = acc_ref[...][:, 0, :]                    # (RB, H) f32
        w32 = w_ref[...].astype(jnp.float32)                  # (1, H)
        raw = jax.lax.dot_general(                            # (1, RB) on the MXU
            w32, pooled_sum,
            dimension_numbers=(((1,), (1,)), ((), ())),
            preferred_element_type=jnp.float32)
        # mean-pool (divide by precomputed, clamped valid-token count) + bias;
        # division by a per-row scalar commutes with the linear head.
        logits = raw / cnt_ref[0] + b_ref[0]                  # (1, RB)
        if use_sigmoid:                                       # model_args.sigmoid_normalize
            logits = jax.nn.sigmoid(logits)
        scores_ref[0] = logits / temperature                  # lane-dense store


def _pick_blocks(BP: int, S: int, H: int, itemsize: int, *,
                 target_bytes: int = 4 << 20):
    """Pick (row_block RB, seq_tile TS) so each grid step DMAs a ~1-4 MiB hidden
    block (this workload is HBM-bandwidth bound; >=1 MiB blocks are needed to
    approach the HBM roofline) while the double-buffered footprint stays well
    inside every generation's VMEM (v7x: 64 MiB physical, v5e: 16 MiB default
    scoped)."""
    # Sequence tile: full S if one row fits the target, else the largest
    # 128-multiple divisor of S that fits (keeps the (8,128) tiling rule happy).
    if S * H * itemsize <= target_bytes:
        ts = S
    else:
        ts = S
        for cand in (4096, 2048, 1024, 512, 256, 128):
            if S % cand == 0 and cand * H * itemsize <= target_bytes:
                ts = cand
                break
    # Row block: as many rows per step as fit (bigger DMAs, better MXU shape for
    # the classifier matvec, lane-denser score output), dividing BP exactly and
    # preferring >= 2 row blocks so the "parallel" axis can shard across
    # TensorCores (v7x has 2 TCs/chip).
    rows_fit = max(1, target_bytes // (ts * H * itemsize))
    candidates = [c for c in (128, 64, 32, 16, 8, 4, 2, 1)
                  if BP % c == 0 and c <= rows_fit]
    rb = next((c for c in candidates if BP // c >= 2), candidates[0])
    return rb, ts


def cross_encoder_forward(hidden, mask, w, b, *,
                          temperature: float = 1.0,
                          sigmoid_normalize: bool = False,
                          row_block: int | None = None,
                          seq_tile: int | None = None):
    """Training-mode CrossEncoder forward. Returns a dict mimicking
    SequenceClassifierOutputWithLogs(loss, logits, logs)."""
    B, P, S, H = hidden.shape
    BP = B * P
    itemsize = jnp.dtype(hidden.dtype).itemsize

    rb0, ts0 = _pick_blocks(BP, S, H, itemsize)
    RB = row_block if row_block is not None else rb0
    TS = seq_tile if seq_tile is not None else ts0
    assert BP % RB == 0, "B*P must be divisible by the row block"
    assert S % TS == 0, "sequence length must be divisible by the sequence tile"
    NR, KT = BP // RB, S // TS

    # Layout plumbing (cheap XLA reshapes / tiny reductions):
    #  * rows flattened; mask with S on the lane axis, pre-cast to the hidden
    #    dtype (0/1 exact in bf16) -> no in-kernel cast, halved mask traffic.
    #  * valid-token counts computed once here (touches only BP*S elements) and
    #    fed lane-dense so the kernel never does a per-chunk cross-lane reduce.
    h2 = hidden.reshape(BP, S, H)
    m2 = mask.reshape(BP, 1, S).astype(hidden.dtype)
    cnt = jnp.maximum(jnp.sum(mask.reshape(BP, S).astype(jnp.float32), axis=1), 1.0)
    cnt3 = cnt.reshape(NR, 1, RB)

    # VMEM budget: double-buffered hidden + mask blocks, f32 accumulator
    # (padded to 8 sublanes), plus slack.  Raise the scoped limit explicitly so
    # larger blocks never trip the 16 MiB (v5e) default, capped well under the
    # 64 MiB physical VMEM of a v7x TensorCore.
    hidden_blk = RB * TS * H * itemsize
    mask_blk = RB * 8 * TS * itemsize
    acc_bytes = RB * 8 * H * 4
    need = 2 * (hidden_blk + mask_blk) + acc_bytes + (2 << 20)
    vmem_limit = int(min(max(2 * need, 32 << 20), 48 << 20))

    kernel = functools.partial(cross_encoder_kernel,
                               temperature=float(temperature),
                               use_sigmoid=bool(sigmoid_normalize))

    scores3 = pl.pallas_call(
        kernel,
        grid=(NR, KT),
        in_specs=[
            # hidden: (RB, TS, H) chunk of RB rows per step
            pl.BlockSpec((RB, TS, H), lambda i, k: (i, k, 0)),
            # mask: matching (RB, 1, TS) chunk, S on the lane axis
            pl.BlockSpec((RB, 1, TS), lambda i, k: (i, 0, k)),
            # clamped valid-token counts, lane-dense per row block
            pl.BlockSpec((1, 1, RB), lambda i, k: (i, 0, 0)),
            # classifier weight: whole (1, H) row, constant block index
            pl.BlockSpec((1, H), lambda i, k: (0, 0)),
            # classifier bias: scalar in SMEM
            pl.BlockSpec(memory_space=pltpu.MemorySpace.SMEM),
        ],
        out_specs=pl.BlockSpec((1, 1, RB), lambda i, k: (i, 0, 0)),
        out_shape=jax.ShapeDtypeStruct((NR, 1, RB), jnp.float32),
        scratch_shapes=[pltpu.VMEM((RB, 1, H), jnp.float32)],   # masked-sum accumulator
        compiler_params=pltpu.CompilerParams(
            dimension_semantics=("parallel", "arbitrary"),
            vmem_limit_bytes=vmem_limit),
    )(h2, m2, cnt3, w, b)

    scores = scores3.reshape(B, P)             # == logits.view(batch, n_passages)

    # nn.CrossEntropyLoss(reduction='mean') with target_label == zeros, done in
    # plain JAX on B*P scalars (hoisted out of the kernel).
    loss = jnp.mean(jax.nn.logsumexp(scores, axis=1) - scores[:, 0])

    logits = scores.reshape(BP, 1)             # PyTorch logits shape (B*P, 1)
    return {
        "loss": loss,
        "logits": logits,
        "logs": {"temperature": temperature},
    }


def _reference(hidden, mask, w, b, *, temperature, sigmoid_normalize):
    """Pure-JAX reference for the same computation."""
    h = hidden.astype(jnp.float32)
    m = mask.astype(jnp.float32)
    pooled = jnp.sum(h * m[..., None], axis=2) / jnp.maximum(
        jnp.sum(m, axis=2, keepdims=True), 1.0)
    logits = jnp.sum(pooled * w[0, :], axis=-1) + b[0]
    if sigmoid_normalize:
        logits = jax.nn.sigmoid(logits)
    scores = logits / temperature
    loss = jnp.mean(jax.nn.logsumexp(scores, axis=1) - scores[:, 0])
    return scores.reshape(-1, 1), loss


if __name__ == "__main__":
    # per_device_train_batch_size=2, train_n_passages=8, seq=256, hidden=64
    # (small demo; production H >= 768 — tile choices are re-derived per shape).
    B, P, S, H = 2, 8, 256, 64
    temperature = 0.5
    sigmoid_normalize = True

    key = jax.random.PRNGKey(0)
    k_h, k_w, k_l = jax.random.split(key, 3)

    hidden = jax.random.normal(k_h, (B, P, S, H), dtype=jnp.float32)
    # per-passage valid lengths; force one full and one fully-padded passage to
    # exercise the denominator clamp.
    lens = jax.random.randint(k_l, (B, P), 0, S + 1)
    lens = lens.at[0, 0].set(S).at[1, 2].set(0)
    mask = (jnp.arange(S)[None, None, :] < lens[..., None]).astype(jnp.float32)

    w = jax.random.normal(k_w, (1, H), dtype=jnp.float32) * 0.02
    b = jnp.full((1,), 0.1, dtype=jnp.float32)

    ref_logits, ref_loss = _reference(hidden, mask, w, b,
                                      temperature=temperature,
                                      sigmoid_normalize=sigmoid_normalize)

    # (a) explicit small blocks: grid = (2, 2) — exercises the multi-chunk
    #     accumulation path and multiple row blocks.
    out = cross_encoder_forward(hidden, mask, w, b,
                                temperature=temperature,
                                sigmoid_normalize=sigmoid_normalize,
                                row_block=8, seq_tile=128)
    jax.block_until_ready(out["loss"])
    jax.block_until_ready(out["logits"])
    assert jnp.allclose(out["logits"], ref_logits, atol=1e-5, rtol=1e-5)
    assert jnp.allclose(out["loss"], ref_loss, atol=1e-5, rtol=1e-5)

    # (b) auto-picked blocks (production path).
    out2 = cross_encoder_forward(hidden, mask, w, b,
                                 temperature=temperature,
                                 sigmoid_normalize=sigmoid_normalize)
    jax.block_until_ready(out2["loss"])
    assert jnp.allclose(out2["logits"], ref_logits, atol=1e-5, rtol=1e-5)
    assert jnp.allclose(out2["loss"], ref_loss, atol=1e-5, rtol=1e-5)

    print("KERNEL_OK")
</pallas_src>

<mosaic_0001>
module attributes {stable_mosaic.version = 11 : i64} {
  func.func @cross_encoder_kernel(%arg0: i32, %arg1: i32, %arg2: memref<8x128x64xf32, #tpu.memory_space<vmem>>, %arg3: memref<8x1x128xf32, #tpu.memory_space<vmem>>, %arg4: memref<1x1x8xf32, #tpu.memory_space<vmem>>, %arg5: memref<1x64xf32, #tpu.memory_space<vmem>>, %arg6: memref<1xf32, #tpu.memory_space<smem>>, %arg7: memref<1x1x8xf32, #tpu.memory_space<vmem>>, %arg8: memref<8x1x64xf32, #tpu.memory_space<vmem>>) attributes {dimension_semantics = [#tpu.dimension_semantics<parallel>, #tpu.dimension_semantics<arbitrary>], iteration_bounds = array<i64: 2, 2>, scalar_prefetch = 0 : i64, scratch_operands = 1 : i64, tpu.core_type = #tpu.core_type<tc>, window_params = [{transform_indices = @transform_0, window_bounds = array<i64: 8, 128, 64>}, {transform_indices = @transform_1, window_bounds = array<i64: 8, 1, 128>}, {transform_indices = @transform_2, window_bounds = array<i64: 1, 1, 8>}, {pipeline_mode = #tpu.pipeline_mode<synchronous>, transform_indices = @transform_3, window_bounds = array<i64: 1, 64>}, {transform_indices = @transform_4, window_bounds = array<i64: 1>}, {transform_indices = @transform_5, window_bounds = array<i64: 1, 1, 8>}]} {
    %c0_i32 = arith.constant 0 : i32
    %0 = arith.cmpi eq, %arg1, %c0_i32 : i32
    %1 = arith.extui %0 : i1 to i32
    %c0_i32_0 = arith.constant 0 : i32
    %2 = arith.cmpi ne, %1, %c0_i32_0 : i32
    scf.if %2 {
      %cst_13 = arith.constant 0.000000e+00 : f32
      %12 = vector.broadcast %cst_13 : f32 to vector<8x1x64xf32>
      %c0_14 = arith.constant 0 : index
      %c0_15 = arith.constant 0 : index
      %c0_16 = arith.constant 0 : index
      %13 = vector.load %arg8[%c0_14, %c0_15, %c0_16] : memref<8x1x64xf32, #tpu.memory_space<vmem>>, vector<8x1x64xf32>
      tpu.vector_store %arg8[%c0_14, %c0_15, %c0_16], %12 {strides = array<i32>} : memref<8x1x64xf32, #tpu.memory_space<vmem>>, vector<8x1x64xf32>,
    } else {
    }
    %c0 = arith.constant 0 : index
    %c0_1 = arith.constant 0 : index
    %c0_2 = arith.constant 0 : index
    %3 = vector.load %arg8[%c0, %c0_1, %c0_2] : memref<8x1x64xf32, #tpu.memory_space<vmem>>, vector<8x1x64xf32>
    %c0_3 = arith.constant 0 : index
    %c0_4 = arith.constant 0 : index
    %c0_5 = arith.constant 0 : index
    %4 = vector.load %arg3[%c0_3, %c0_4, %c0_5] : memref<8x1x128xf32, #tpu.memory_space<vmem>>, vector<8x1x128xf32>
    %c0_6 = arith.constant 0 : index
    %c0_7 = arith.constant 0 : index
    %c0_8 = arith.constant 0 : index
    %5 = vector.load %arg2[%c0_6, %c0_7, %c0_8] : memref<8x128x64xf32, #tpu.memory_space<vmem>>, vector<8x128x64xf32>
    "tpu.trace_start"() <{level = 10 : i32, message = "rot,rth->roh"}> : () -> ()
    %cst = arith.constant dense<0.000000e+00> : vector<8x1x64xf32>
    %6 = tpu.matmul %4, %5, %cst {dimension_numbers = #tpu.dot_dimension_numbers<[2], [1], [1], [2], [0, 0, 0, 1, 1, 2], [0], [0]>} : vector<8x1x128xf32>, vector<8x128x64xf32>, vector<8x1x64xf32> -> vector<8x1x64xf32>
    "tpu.trace_stop"() : () -> ()
    %7 = arith.addf %3, %6 : vector<8x1x64xf32>
    %c0_9 = arith.constant 0 : index
    %c0_10 = arith.constant 0 : index
    %c0_11 = arith.constant 0 : index
    %8 = vector.load %arg8[%c0_9, %c0_10, %c0_11] : memref<8x1x64xf32, #tpu.memory_space<vmem>>, vector<8x1x64xf32>
    tpu.vector_store %arg8[%c0_9, %c0_10, %c0_11], %7 {strides = array<i32>} : memref<8x1x64xf32, #tpu.memory_space<vmem>>, vector<8x1x64xf32>,
    %c1_i32 = arith.constant 1 : i32
    %9 = arith.cmpi eq, %arg1, %c1_i32 : i32
    %10 = arith.extui %9 : i1 to i32
    %c0_i32_12 = arith.constant 0 : i32
    %11 = arith.cmpi ne, %10, %c0_i32_12 : i32
    scf.if %11 {
      %c0_13 = arith.constant 0 : index
      %c0_14 = arith.constant 0 : index
      %c0_15 = arith.constant 0 : index
      %12 = vector.load %arg8[%c0_13, %c0_14, %c0_15] : memref<8x1x64xf32, #tpu.memory_space<vmem>>, vector<8x1x64xf32>
      %13 = vector.shape_cast %12 : vector<8x1x64xf32> to vector<8x64xf32>
      %c0_16 = arith.constant 0 : index
      %c0_17 = arith.constant 0 : index
      %14 = vector.load %arg5[%c0_16, %c0_17] : memref<1x64xf32, #tpu.memory_space<vmem>>, vector<1x64xf32>
      %cst_18 = arith.constant dense<0.000000e+00> : vector<1x8xf32>
      %15 = tpu.matmul %14, %13, %cst_18 {dimension_numbers = #tpu.dot_dimension_numbers<[1], [1], [0], [0], [0, 0, 1, 0], [], []>} : vector<1x64xf32>, vector<8x64xf32>, vector<1x8xf32> -> vector<1x8xf32>
      %c0_19 = arith.constant 0 : index
      %c0_20 = arith.constant 0 : index
      %c0_21 = arith.constant 0 : index
      %16 = vector.load %arg4[%c0_19, %c0_20, %c0_21] : memref<1x1x8xf32, #tpu.memory_space<vmem>>, vector<1x1x8xf32>
      %17 = vector.shape_cast %16 : vector<1x1x8xf32> to vector<1x8xf32>
      %18 = arith.divf %15, %17 : vector<1x8xf32>
      %c0_22 = arith.constant 0 : index
      %19 = memref.load %arg6[%c0_22] : memref<1xf32, #tpu.memory_space<smem>>
      %20 = vector.broadcast %19 : f32 to vector<1x8xf32>
      %21 = arith.addf %18, %20 : vector<1x8xf32>
      %22 = arith.negf %21 : vector<1x8xf32>
      %23 = math.exp %22 : vector<1x8xf32>
      %cst_23 = arith.constant 1.000000e+00 : f32
      %24 = vector.broadcast %cst_23 : f32 to vector<1x8xf32>
      %25 = arith.addf %24, %23 : vector<1x8xf32>
      %26 = arith.divf %24, %25 : vector<1x8xf32>
      %cst_24 = arith.constant 5.000000e-01 : f32
      %27 = vector.broadcast %cst_24 : f32 to vector<1x8xf32>
      %28 = arith.divf %26, %27 : vector<1x8xf32>
      %c0_25 = arith.constant 0 : index
      %c0_26 = arith.constant 0 : index
      %c0_27 = arith.constant 0 : index
      %29 = vector.load %arg7[%c0_25, %c0_26, %c0_27] : memref<1x1x8xf32, #tpu.memory_space<vmem>>, vector<1x1x8xf32>
      %30 = vector.shape_cast %29 : vector<1x1x8xf32> to vector<1x8xf32>
      %31 = vector.shape_cast %28 : vector<1x8xf32> to vector<1x1x8xf32>
      tpu.vector_store %arg7[%c0_25, %c0_26, %c0_27], %31 {strides = array<i32>} : memref<1x1x8xf32, #tpu.memory_space<vmem>>, vector<1x1x8xf32>,
    } else {
    }
    return
  }
  func.func @transform_0(%arg0: i32, %arg1: i32) -> (i32, i32, i32) {
    %c0_i32 = arith.constant 0 : i32
    %c0_i32_0 = arith.constant 0 : i32
    return %arg0, %arg1, %c0_i32 : i32, i32, i32
  }
  func.func @transform_1(%arg0: i32, %arg1: i32) -> (i32, i32, i32) {
    %c0_i32 = arith.constant 0 : i32
    %c0_i32_0 = arith.constant 0 : i32
    return %arg0, %c0_i32, %arg1 : i32, i32, i32
  }
  func.func @transform_2(%arg0: i32, %arg1: i32) -> (i32, i32, i32) {
    %c0_i32 = arith.constant 0 : i32
    %c0_i32_0 = arith.constant 0 : i32
    %c0_i32_1 = arith.constant 0 : i32
    return %arg0, %c0_i32, %c0_i32_0 : i32, i32, i32
  }
  func.func @transform_3(%arg0: i32, %arg1: i32) -> (i32, i32) {
    %c0_i32 = arith.constant 0 : i32
    %c0_i32_0 = arith.constant 0 : i32
    %c0_i32_1 = arith.constant 0 : i32
    return %c0_i32, %c0_i32_0 : i32, i32
  }
  func.func @transform_4(%arg0: i32, %arg1: i32) -> i32 {
    %c0_i32 = arith.constant 0 : i32
    %c0_i32_0 = arith.constant 0 : i32
    return %c0_i32 : i32
  }
  func.func @transform_5(%arg0: i32, %arg1: i32) -> (i32, i32, i32) {
    %c0_i32 = arith.constant 0 : i32
    %c0_i32_0 = arith.constant 0 : i32
    %c0_i32_1 = arith.constant 0 : i32
    return %arg0, %c0_i32, %c0_i32_0 : i32, i32, i32
  }
}

</mosaic_0001>

<llo_original>
// kernel: tpu_custom_call.1
$region0: #{tpu_custom_call.1}
  #allocation0 [shape = 'u32[]', space=smem, size = 0x4, offset = 0x4, fixed_abs, tag = 'smem constant byte address 0x4 - core index']
  #allocation1 [shape = 'u32[144,128]{1,0:T(1,128)}', space=vmem, size = 0x12000, scoped, tag = 'internal scratch']
  #allocation2 [shape = 'f32[8,1,64]{2,1,0:T(1,128)}', space=vmem, size = 0x1000, scoped, tag = 'scratch operand']
  #allocation3 [shape = 'f32[1]{0:T(128)S(6)}', space=smem, size = 0x200, scoped, tag = 'scoped memory for tpu_custom_call.1']
  %s0 = inlined_call_operand.vmem [shape: f32[16,256,64], index: 0, kind: input, shape index: {}]
  %s1 = inlined_call_operand.vmem [shape: f32[16,1,256], index: 1, kind: input, shape index: {}]
  %s2 = inlined_call_operand.vmem [shape: f32[2,1,8], index: 2, kind: input, shape index: {}]
  %s3 = inlined_call_operand.vmem [shape: f32[1,64], index: 3, kind: input, shape index: {}]
  %s4 = inlined_call_operand.<no memory space> [shape: f32[1], index: 4, kind: input, shape index: {}]
  %s5 = inlined_call_operand.hbm [shape: f32[2,1,8], index: 5, kind: output, shape index: {}]
  %s6 = sld [smem:[#allocation0]]
  $region140: #{tpu_custom_call.1} parent=0
    _
  %s8 = ssub.s32 1, %s6
  %s9 = scalar_select 0, %s8, %s6
  %10 = sst [smem:[#allocation3]] %s4
  $region1: #{tpu_custom_call.1} parent=0
    #allocation4 [shape = 'u8[1048576]{0}', space=vmem, size = 0x100000, scoped, tag = 'input window, operand 0']
    #allocation5 [shape = 'u8[8192]{0}', space=vmem, size = 0x2000, scoped, tag = 'input window, operand 1']
    #allocation6 [shape = 'u8[1024]{0}', space=vmem, size = 0x400, scoped, tag = 'output window, operand 0']
    #allocation7 [shape = 's32[2]{0}', space=sflag, size = 0x8, scoped, tag = 'scoped memory for tpu_custom_call.1']
    %11 = vsyncpa [#allocation7], 0
    %s12 = scalar_lea.sflag [#allocation7], 1
    %13 = vsyncpa %s12, 0
    loop: start=0, step=1, limit=6
    $region2: #{tpu_custom_call.1} parent=1 // loop_pre_header
      _
    $region3: #{tpu_custom_call.1} parent=1 // loop_header
      %s15 = sphi 0, %s19
      %p16 = scmp.ge.s32.totalorder %s15, 6
      %s22 = sphi 0, %s34
      %s23 = sphi 0, %s30
      %s24 = sphi 0, %s22
      %s25 = sphi 0, %s23
      %s26 = sphi 0, %s24
      %s27 = sphi 0, %s25
      %s39 = sphi 0, %s41
      %s42 = sphi 0, %s39
      %s43 = sphi 0, %s42
      %s59 = sphi 0, %s43
      %s67 = sphi 0, %s69
      %s70 = sphi 0, %s67
      %s71 = sphi 0, %s70
      %s87 = sphi 0, %s71
      %s93 = sphi 0, %s95
      %s96 = sphi 0, %s93
      %s97 = sphi 0, %s96
      %s113 = sphi 0, %s97
      %s117 = sphi 0, %s117
      %s119 = sphi 0, %s117
      %s120 = sphi 0, %s119
      %s134 = sphi 0, %s120
      %s138 = sphi 0, %s138
      %s140 = sphi 0, %s138
      %s141 = sphi 0, %s140
      %s155 = sphi 0, %s141
      %s161 = sphi 0, %s163
      %s164 = sphi 0, %s161
      %s165 = sphi 0, %s164
      %s181 = sphi 0, %s165
    $region4: #{tpu_custom_call.1} parent=1 // loop_header_branch
      %18 = sbr.rel (%p16) target = $region8
    $region5: #{tpu_custom_call.1} parent=1 // loop_body
      %s20 = ssub.s32 %s15, 1
      %s21 = ssub.s32 %s15, 2
      %s28 = sadd.s32 1, %s23
      %p29 = scmp.ge.s32.totalorder %s28, 2
      %s30 = scalar_select %p29, 0, %s28
      %s31 = sadd.s32 1, %s22
      %s32 = scalar_select %p29, %s31, %s22
      %p33 = scmp.ge.s32.totalorder %s32, 2
      %s34 = scalar_select %p33, 0, %s32
      %s35 = ssub.s32 %s22, %s34
      %s36 = ssub.s32 %s23, %s30
      %s37 = sor.u32 %s35, %s36
      %p38 = scmp.eq.s32.totalorder %s37, 0
      %s40 = sadd.s32 %s39, 1
      %s41 = scalar_select %p38, %s39, %s40
      %p44 = pneg %p38
      %p45 = scmp.eq.s32.totalorder %s15, 3
      %p46 = por %p44, %p45
      %p47 = scmp.ne.s32.totalorder %s39, %s42
      %p48 = scmp.eq.s32.totalorder %s15, 0
      %p49 = por %p47, %p48
      %p50 = scmp.ne.s32.totalorder %s39, %s42
      %p51 = scmp.eq.s32.totalorder %s20, 3
      %p52 = por %p50, %p51
      %p53 = scmp.ne.s32.totalorder %s42, %s43
      %p54 = scmp.eq.s32.totalorder %s20, 0
      %p55 = por %p53, %p54
      %p56 = scmp.ne.s32.totalorder %s42, %s43
      %p57 = scmp.eq.s32.totalorder %s21, 3
      %p58 = por %p56, %p57
      %p60 = scmp.ne.s32.totalorder %s43, %s59
      %p61 = scmp.eq.s32.totalorder %s21, 0
      %p62 = por %p60, %p61
      %s63 = ssub.s32 %s22, %s34
      %s64 = ssub.s32 %s23, %s30
      %s65 = sor.u32 %s63, %s64
      %p66 = scmp.eq.s32.totalorder %s65, 0
      %s68 = sadd.s32 %s67, 1
      %s69 = scalar_select %p66, %s67, %s68
      %p72 = pneg %p66
      %p73 = scmp.eq.s32.totalorder %s15, 3
      %p74 = por %p72, %p73
      %p75 = scmp.ne.s32.totalorder %s67, %s70
      %p76 = scmp.eq.s32.totalorder %s15, 0
      %p77 = por %p75, %p76
      %p78 = scmp.ne.s32.totalorder %s67, %s70
      %p79 = scmp.eq.s32.totalorder %s20, 3
      %p80 = por %p78, %p79
      %p81 = scmp.ne.s32.totalorder %s70, %s71
      %p82 = scmp.eq.s32.totalorder %s20, 0
      %p83 = por %p81, %p82
      %p84 = scmp.ne.s32.totalorder %s70, %s71
      %p85 = scmp.eq.s32.totalorder %s21, 3
      %p86 = por %p84, %p85
      %p88 = scmp.ne.s32.totalorder %s71, %s87
      %p89 = scmp.eq.s32.totalorder %s21, 0
      %p90 = por %p88, %p89
      %s91 = ssub.s32 %s22, %s34
      %p92 = scmp.eq.s32.totalorder %s91, 0
      %s94 = sadd.s32 %s93, 1
      %s95 = scalar_select %p92, %s93, %s94
      %p98 = pneg %p92
      %p99 = scmp.eq.s32.totalorder %s15, 3
      %p100 = por %p98, %p99
      %p101 = scmp.ne.s32.totalorder %s93, %s96
      %p102 = scmp.eq.s32.totalorder %s15, 0
      %p103 = por %p101, %p102
      %p104 = scmp.ne.s32.totalorder %s93, %s96
      %p105 = scmp.eq.s32.totalorder %s20, 3
      %p106 = por %p104, %p105
      %p107 = scmp.ne.s32.totalorder %s96, %s97
      %p108 = scmp.eq.s32.totalorder %s20, 0
      %p109 = por %p107, %p108
      %p110 = scmp.ne.s32.totalorder %s96, %s97
      %p111 = scmp.eq.s32.totalorder %s21, 3
      %p112 = por %p110, %p111
      %p114 = scmp.ne.s32.totalorder %s97, %s113
      %p115 = scmp.eq.s32.totalorder %s21, 0
      %p116 = por %p114, %p115
      %s118 = sadd.s32 %s117, 1
      %p121 = scmp.eq.s32.totalorder %s15, 3
      %p122 = scmp.ne.s32.totalorder %s117, %s119
      %p123 = scmp.eq.s32.totalorder %s15, 0
      %p124 = por %p122, %p123
      %p125 = scmp.ne.s32.totalorder %s117, %s119
      %p126 = scmp.eq.s32.totalorder %s20, 3
      %p127 = por %p125, %p126
      %p128 = scmp.ne.s32.totalorder %s119, %s120
      %p129 = scmp.eq.s32.totalorder %s20, 0
      %p130 = por %p128, %p129
      %p131 = scmp.ne.s32.totalorder %s119, %s120
      %p132 = scmp.eq.s32.totalorder %s21, 3
      %p133 = por %p131, %p132
      %p135 = scmp.ne.s32.totalorder %s120, %s134
      %p136 = scmp.eq.s32.totalorder %s21, 0
      %p137 = por %p135, %p136
      %s139 = sadd.s32 %s138, 1
      %p142 = scmp.eq.s32.totalorder %s15, 3
      %p143 = scmp.ne.s32.totalorder %s138, %s140
      %p144 = scmp.eq.s32.totalorder %s15, 0
      %p145 = por %p143, %p144
      %p146 = scmp.ne.s32.totalorder %s138, %s140
      %p147 = scmp.eq.s32.totalorder %s20, 3
      %p148 = por %p146, %p147
      %p149 = scmp.ne.s32.totalorder %s140, %s141
      %p150 = scmp.eq.s32.totalorder %s20, 0
      %p151 = por %p149, %p150
      %p152 = scmp.ne.s32.totalorder %s140, %s141
      %p153 = scmp.eq.s32.totalorder %s21, 3
      %p154 = por %p152, %p153
      %p156 = scmp.ne.s32.totalorder %s141, %s155
      %p157 = scmp.eq.s32.totalorder %s21, 0
      %p158 = por %p156, %p157
      %s159 = ssub.s32 %s22, %s34
      %p160 = scmp.eq.s32.totalorder %s159, 0
      %s162 = sadd.s32 %s161, 1
      %s163 = scalar_select %p160, %s161, %s162
      %p166 = pneg %p160
      %p167 = scmp.eq.s32.totalorder %s15, 3
      %p168 = por %p166, %p167
      %p169 = scmp.ne.s32.totalorder %s161, %s164
      %p170 = scmp.eq.s32.totalorder %s15, 0
      %p171 = por %p169, %p170
      %p172 = scmp.ne.s32.totalorder %s161, %s164
      %p173 = scmp.eq.s32.totalorder %s20, 3
      %p174 = por %p172, %p173
      %p175 = scmp.ne.s32.totalorder %s164, %s165
      %p176 = scmp.eq.s32.totalorder %s20, 0
      %p177 = por %p175, %p176
      %p178 = scmp.ne.s32.totalorder %s164, %s165
      %p179 = scmp.eq.s32.totalorder %s21, 3
      %p180 = por %p178, %p179
      %p182 = scmp.ne.s32.totalorder %s165, %s181
      %p183 = scmp.eq.s32.totalorder %s21, 0
      %p184 = por %p182, %p183
      %p185 = scmp.le.s32.totalorder 1, %s15
      %p186 = scmp.lt.s32.totalorder %s15, 5
      %p187 = pnand %p185, %p186
      %p188 = pneg %p187
      // Predicated region
      $region9: #{tpu_custom_call.1} parent=5 // pred_check
        _
      $region10: #{tpu_custom_call.1} parent=5 // pred_check_branch
        %190 = sbr.rel (%p187) target = $region12
      $region11: #{tpu_custom_call.1} parent=5 // pred_region
        %s191 = ssub.s32 %s15, 1
        // Predicated region
        $region13: #{tpu_custom_call.1} parent=11 // pred_check
          %p192 = pneg %p130
        $region14: #{tpu_custom_call.1} parent=11 // pred_check_branch
          %194 = sbr.rel (%p192) target = $region16
        $region15: #{tpu_custom_call.1} parent=11 // pred_region
          _
        $region16: #{tpu_custom_call.1} parent=11 // pred_fallthru
          _
        // Predicated region
        $region17: #{tpu_custom_call.1} parent=11 // pred_check
          %p195 = pneg %p151
        $region18: #{tpu_custom_call.1} parent=11 // pred_check_branch
          %197 = sbr.rel (%p195) target = $region20
        $region19: #{tpu_custom_call.1} parent=11 // pred_region
          _
        $region20: #{tpu_custom_call.1} parent=11 // pred_fallthru
          _
      $region12: #{tpu_custom_call.1} parent=5 // pred_fallthru
        _
      %p198 = scmp.lt.s32.totalorder %s15, 4
      // Predicated region
      $region21: #{tpu_custom_call.1} parent=5 // pred_check
        %p199 = pneg %p198
      $region22: #{tpu_custom_call.1} parent=5 // pred_check_branch
        %201 = sbr.rel (%p199) target = $region24
      $region23: #{tpu_custom_call.1} parent=5 // pred_region
        // Predicated region
        $region25: #{tpu_custom_call.1} parent=23 // pred_check
          %p202 = pneg %p49
        $region26: #{tpu_custom_call.1} parent=23 // pred_check_branch
          %204 = sbr.rel (%p202) target = $region28
        $region27: #{tpu_custom_call.1} parent=23 // pred_region
          %s205 = sand.u32 %s39, 1
          %s206 = sand.u32 %s39, 1
          %s207 = smul.addr %s206, 1024
          %s208 = scalar_lea.vmem [#allocation4], %s207
          %s209 = smul.u32 8, %s22
          %s210 = smul.u32 16, %s23
          %s211 = smul.addr %s209, 32
          %s212 = sadd.s32 %s210, %s211
          %s213 = smul.addr %s212, 8
          %s214 = scalar_lea.vmem %s0, %s213
          // Predicated region
          $region29: #{tpu_custom_call.1} parent=27 // pred_check
            _
          $region30: #{tpu_custom_call.1} parent=27 // pred_check_branch
            %216 = sbr.rel (0) target = $region32
          $region31: #{tpu_custom_call.1} parent=27 // pred_region
            // Predicated region
            $region33: #{tpu_custom_call.1} parent=31 // pred_check
              _
            $region34: #{tpu_custom_call.1} parent=31 // pred_check_branch
              %218 = sbr.rel (0) target = $region36
            $region35: #{tpu_custom_call.1} parent=31 // pred_region
              // Predicated region
              $region48: #{tpu_custom_call.1} parent=35 // pred_check
                _
              $region49: #{tpu_custom_call.1} parent=35 // pred_check_branch
                %487 = sbr.rel (0) target = $region51
              $region50: #{tpu_custom_call.1} parent=35 // pred_region
                loop: start=0, step=1, limit=1
                $region52: #{tpu_custom_call.1} parent=50 // loop_pre_header
                  _
                $region53: #{tpu_custom_call.1} parent=50 // loop_header
                  %s489 = sphi 0, %s493
                  %p490 = scmp.ge.s32.totalorder %s489, 1
                  %s494 = sphi %s214, %s214
                  %s495 = sphi %s208, %s208
                $region54: #{tpu_custom_call.1} parent=50 // loop_header_branch
                  %492 = sbr.rel (%p490) target = $region58
                $region55: #{tpu_custom_call.1} parent=50 // loop_body
                  %v496 = vld [vmem:[%s494] sm:$0xff]
                  %497 = vst [vmem:[%s495] sm:$0xff] %v496
                  %v498 = vld [vmem:[%s494 + $0x8] sm:$0xff]
                  %499 = vst [vmem:[%s495 + $0x8] sm:$0xff] %v498
                  %v500 = vld [vmem:[%s494 + $0x10] sm:$0xff]
                  %501 = vst [vmem:[%s495 + $0x10] sm:$0xff] %v500
                  %v502 = vld [vmem:[%s494 + $0x18] sm:$0xff]
                  %503 = vst [vmem:[%s495 + $0x18] sm:$0xff] %v502
                  %v504 = vld [vmem:[%s494 + $0x20] sm:$0xff]
                  %505 = vst [vmem:[%s495 + $0x20] sm:$0xff] %v504
                  %v506 = vld [vmem:[%s494 + $0x28] sm:$0xff]
                  %507 = vst [vmem:[%s495 + $0x28] sm:$0xff] %v506
                  %v508 = vld [vmem:[%s494 + $0x30] sm:$0xff]
                  %509 = vst [vmem:[%s495 + $0x30] sm:$0xff] %v508
                  %v510 = vld [vmem:[%s494 + $0x38] sm:$0xff]
                  %511 = vst [vmem:[%s495 + $0x38] sm:$0xff] %v510
                  %v512 = vld [vmem:[%s494 + $0x40] sm:$0xff]
                  %513 = vst [vmem:[%s495 + $0x40] sm:$0xff] %v512
                  %v514 = vld [vmem:[%s494 + $0x48] sm:$0xff]
                  %515 = vst [vmem:[%s495 + $0x48] sm:$0xff] %v514
                  %v516 = vld [vmem:[%s494 + $0x50] sm:$0xff]
                  %517 = vst [vmem:[%s495 + $0x50] sm:$0xff] %v516
                  %v518 = vld [vmem:[%s494 + $0x58] sm:$0xff]
                  %519 = vst [vmem:[%s495 + $0x58] sm:$0xff] %v518
                  %v520 = vld [vmem:[%s494 + $0x60] sm:$0xff]
                  %521 = vst [vmem:[%s495 + $0x60] sm:$0xff] %v520
                  %v522 = vld [vmem:[%s494 + $0x68] sm:$0xff]
                  %523 = vst [vmem:[%s495 + $0x68] sm:$0xff] %v522
                  %v524 = vld [vmem:[%s494 + $0x70] sm:$0xff]
                  %525 = vst [vmem:[%s495 + $0x70] sm:$0xff] %v524
                  %v526 = vld [vmem:[%s494 + $0x78] sm:$0xff]
                  %527 = vst [vmem:[%s495 + $0x78] sm:$0xff] %v526
                  %v528 = vld [vmem:[%s494 + $0x100] sm:$0xff]
                  %529 = vst [vmem:[%s495 + $0x80] sm:$0xff] %v528
                  %v530 = vld [vmem:[%s494 + $0x108] sm:$0xff]
                  %531 = vst [vmem:[%s495 + $0x88] sm:$0xff] %v530
                  %v532 = vld [vmem:[%s494 + $0x110] sm:$0xff]
                  %533 = vst [vmem:[%s495 + $0x90] sm:$0xff] %v532
                  %v534 = vld [vmem:[%s494 + $0x118] sm:$0xff]
                  %535 = vst [vmem:[%s495 + $0x98] sm:$0xff] %v534
                  %v536 = vld [vmem:[%s494 + $0x120] sm:$0xff]
                  %537 = vst [vmem:[%s495 + $0xa0] sm:$0xff] %v536
                  %v538 = vld [vmem:[%s494 + $0x128] sm:$0xff]
                  %539 = vst [vmem:[%s495 + $0xa8] sm:$0xff] %v538
                  %v540 = vld [vmem:[%s494 + $0x130] sm:$0xff]
                  %541 = vst [vmem:[%s495 + $0xb0] sm:$0xff] %v540
                  %v542 = vld [vmem:[%s494 + $0x138] sm:$0xff]
                  %543 = vst [vmem:[%s495 + $0xb8] sm:$0xff] %v542
                  %v544 = vld [vmem:[%s494 + $0x140] sm:$0xff]
                  %545 = vst [vmem:[%s495 + $0xc0] sm:$0xff] %v544
                  %v546 = vld [vmem:[%s494 + $0x148] sm:$0xff]
                  %547 = vst [vmem:[%s495 + $0xc8] sm:$0xff] %v546
                  %v548 = vld [vmem:[%s494 + $0x150] sm:$0xff]
                  %549 = vst [vmem:[%s495 + $0xd0] sm:$0xff] %v548
                  %v550 = vld [vmem:[%s494 + $0x158] sm:$0xff]
                  %551 = vst [vmem:[%s495 + $0xd8] sm:$0xff] %v550
                  %v552 = vld [vmem:[%s494 + $0x160] sm:$0xff]
                  %553 = vst [vmem:[%s495 + $0xe0] sm:$0xff] %v552
                  %v554 = vld [vmem:[%s494 + $0x168] sm:$0xff]
                  %555 = vst [vmem:[%s495 + $0xe8] sm:$0xff] %v554
                  %v556 = vld [vmem:[%s494 + $0x170] sm:$0xff]
                  %557 = vst [vmem:[%s495 + $0xf0] sm:$0xff] %v556
                  %v558 = vld [vmem:[%s494 + $0x178] sm:$0xff]
                  %559 = vst [vmem:[%s495 + $0xf8] sm:$0xff] %v558
                  %v560 = vld [vmem:[%s494 + $0x200] sm:$0xff]
                  %561 = vst [vmem:[%s495 + $0x100] sm:$0xff] %v560
                  %v562 = vld [vmem:[%s494 + $0x208] sm:$0xff]
                  %563 = vst [vmem:[%s495 + $0x108] sm:$0xff] %v562
                  %v564 = vld [vmem:[%s494 + $0x210] sm:$0xff]
                  %565 = vst [vmem:[%s495 + $0x110] sm:$0xff] %v564
                  %v566 = vld [vmem:[%s494 + $0x218] sm:$0xff]
                  %567 = vst [vmem:[%s495 + $0x118] sm:$0xff] %v566
                  %v568 = vld [vmem:[%s494 + $0x220] sm:$0xff]
                  %569 = vst [vmem:[%s495 + $0x120] sm:$0xff] %v568
                  %v570 = vld [vmem:[%s494 + $0x228] sm:$0xff]
                  %571 = vst [vmem:[%s495 + $0x128] sm:$0xff] %v570
                  %v572 = vld [vmem:[%s494 + $0x230] sm:$0xff]
                  %573 = vst [vmem:[%s495 + $0x130] sm:$0xff] %v572
                  %v574 = vld [vmem:[%s494 + $0x238] sm:$0xff]
                  %575 = vst [vmem:[%s495 + $0x138] sm:$0xff] %v574
                  %v576 = vld [vmem:[%s494 + $0x240] sm:$0xff]
                  %577 = vst [vmem:[%s495 + $0x140] sm:$0xff] %v576
                  %v578 = vld [vmem:[%s494 + $0x248] sm:$0xff]
                  %579 = vst [vmem:[%s495 + $0x148] sm:$0xff] %v578
                  %v580 = vld [vmem:[%s494 + $0x250] sm:$0xff]
                  %581 = vst [vmem:[%s495 + $0x150] sm:$0xff] %v580
                  %v582 = vld [vmem:[%s494 + $0x258] sm:$0xff]
                  %583 = vst [vmem:[%s495 + $0x158] sm:$0xff] %v582
                  %v584 = vld [vmem:[%s494 + $0x260] sm:$0xff]
                  %585 = vst [vmem:[%s495 + $0x160] sm:$0xff] %v584
                  %v586 = vld [vmem:[%s494 + $0x268] sm:$0xff]
                  %587 = vst [vmem:[%s495 + $0x168] sm:$0xff] %v586
                  %v588 = vld [vmem:[%s494 + $0x270] sm:$0xff]
                  %589 = vst [vmem:[%s495 + $0x170] sm:$0xff] %v588
                  %v590 = vld [vmem:[%s494 + $0x278] sm:$0xff]
                  %591 = vst [vmem:[%s495 + $0x178] sm:$0xff] %v590
                  %v592 = vld [vmem:[%s494 + $0x300] sm:$0xff]
                  %593 = vst [vmem:[%s495 + $0x180] sm:$0xff] %v592
                  %v594 = vld [vmem:[%s494 + $0x308] sm:$0xff]
                  %595 = vst [vmem:[%s495 + $0x188] sm:$0xff] %v594
                  %v596 = vld [vmem:[%s494 + $0x310] sm:$0xff]
                  %597 = vst [vmem:[%s495 + $0x190] sm:$0xff] %v596
                  %v598 = vld [vmem:[%s494 + $0x318] sm:$0xff]
                  %599 = vst [vmem:[%s495 + $0x198] sm:$0xff] %v598
                  %v600 = vld [vmem:[%s494 + $0x320] sm:$0xff]
                  %601 = vst [vmem:[%s495 + $0x1a0] sm:$0xff] %v600
                  %v602 = vld [vmem:[%s494 + $0x328] sm:$0xff]
                  %603 = vst [vmem:[%s495 + $0x1a8] sm:$0xff] %v602
                  %v604 = vld [vmem:[%s494 + $0x330] sm:$0xff]
                  %605 = vst [vmem:[%s495 + $0x1b0] sm:$0xff] %v604
                  %v606 = vld [vmem:[%s494 + $0x338] sm:$0xff]
                  %607 = vst [vmem:[%s495 + $0x1b8] sm:$0xff] %v606
                  %v608 = vld [vmem:[%s494 + $0x340] sm:$0xff]
                  %609 = vst [vmem:[%s495 + $0x1c0] sm:$0xff] %v608
                  %v610 = vld [vmem:[%s494 + $0x348] sm:$0xff]
                  %611 = vst [vmem:[%s495 + $0x1c8] sm:$0xff] %v610
                  %v612 = vld [vmem:[%s494 + $0x350] sm:$0xff]
                  %613 = vst [vmem:[%s495 + $0x1d0] sm:$0xff] %v612
                  %v614 = vld [vmem:[%s494 + $0x358] sm:$0xff]
                  %615 = vst [vmem:[%s495 + $0x1d8] sm:$0xff] %v614
                  %v616 = vld [vmem:[%s494 + $0x360] sm:$0xff]
                  %617 = vst [vmem:[%s495 + $0x1e0] sm:$0xff] %v616
                  %v618 = vld [vmem:[%s494 + $0x368] sm:$0xff]
                  %619 = vst [vmem:[%s495 + $0x1e8] sm:$0xff] %v618
                  %v620 = vld [vmem:[%s494 + $0x370] sm:$0xff]
                  %621 = vst [vmem:[%s495 + $0x1f0] sm:$0xff] %v620
                  %v622 = vld [vmem:[%s494 + $0x378] sm:$0xff]
                  %623 = vst [vmem:[%s495 + $0x1f8] sm:$0xff] %v622
                  %v624 = vld [vmem:[%s494 + $0x400] sm:$0xff]
                  %625 = vst [vmem:[%s495 + $0x200] sm:$0xff] %v624
                  %v626 = vld [vmem:[%s494 + $0x408] sm:$0xff]
                  %627 = vst [vmem:[%s495 + $0x208] sm:$0xff] %v626
                  %v628 = vld [vmem:[%s494 + $0x410] sm:$0xff]
                  %629 = vst [vmem:[%s495 + $0x210] sm:$0xff] %v628
                  %v630 = vld [vmem:[%s494 + $0x418] sm:$0xff]
                  %631 = vst [vmem:[%s495 + $0x218] sm:$0xff] %v630
                  %v632 = vld [vmem:[%s494 + $0x420] sm:$0xff]
                  %633 = vst [vmem:[%s495 + $0x220] sm:$0xff] %v632
                  %v634 = vld [vmem:[%s494 + $0x428] sm:$0xff]
                  %635 = vst [vmem:[%s495 + $0x228] sm:$0xff] %v634
                  %v636 = vld [vmem:[%s494 + $0x430] sm:$0xff]
                  %637 = vst [vmem:[%s495 + $0x230] sm:$0xff] %v636
                  %v638 = vld [vmem:[%s494 + $0x438] sm:$0xff]
                  %639 = vst [vmem:[%s495 + $0x238] sm:$0xff] %v638
                  %v640 = vld [vmem:[%s494 + $0x440] sm:$0xff]
                  %641 = vst [vmem:[%s495 + $0x240] sm:$0xff] %v640
                  %v642 = vld [vmem:[%s494 + $0x448] sm:$0xff]
                  %643 = vst [vmem:[%s495 + $0x248] sm:$0xff] %v642
                  %v644 = vld [vmem:[%s494 + $0x450] sm:$0xff]
                  %645 = vst [vmem:[%s495 + $0x250] sm:$0xff] %v644
                  %v646 = vld [vmem:[%s494 + $0x458] sm:$0xff]
                  %647 = vst [vmem:[%s495 + $0x258] sm:$0xff] %v646
                  %v648 = vld [vmem:[%s494 + $0x460] sm:$0xff]
                  %649 = vst [vmem:[%s495 + $0x260] sm:$0xff] %v648
                  %v650 = vld [vmem:[%s494 + $0x468] sm:$0xff]
                  %651 = vst [vmem:[%s495 + $0x268] sm:$0xff] %v650
                  %v652 = vld [vmem:[%s494 + $0x470] sm:$0xff]
                  %653 = vst [vmem:[%s495 + $0x270] sm:$0xff] %v652
                  %v654 = vld [vmem:[%s494 + $0x478] sm:$0xff]
                  %655 = vst [vmem:[%s495 + $0x278] sm:$0xff] %v654
                  %v656 = vld [vmem:[%s494 + $0x500] sm:$0xff]
                  %657 = vst [vmem:[%s495 + $0x280] sm:$0xff] %v656
                  %v658 = vld [vmem:[%s494 + $0x508] sm:$0xff]
                  %659 = vst [vmem:[%s495 + $0x288] sm:$0xff] %v658
                  %v660 = vld [vmem:[%s494 + $0x510] sm:$0xff]
                  %661 = vst [vmem:[%s495 + $0x290] sm:$0xff] %v660
                  %v662 = vld [vmem:[%s494 + $0x518] sm:$0xff]
                  %663 = vst [vmem:[%s495 + $0x298] sm:$0xff] %v662
                  %v664 = vld [vmem:[%s494 + $0x520] sm:$0xff]
                  %665 = vst [vmem:[%s495 + $0x2a0] sm:$0xff] %v664
                  %v666 = vld [vmem:[%s494 + $0x528] sm:$0xff]
                  %667 = vst [vmem:[%s495 + $0x2a8] sm:$0xff] %v666
                  %v668 = vld [vmem:[%s494 + $0x530] sm:$0xff]
                  %669 = vst [vmem:[%s495 + $0x2b0] sm:$0xff] %v668
                  %v670 = vld [vmem:[%s494 + $0x538] sm:$0xff]
                  %671 = vst [vmem:[%s495 + $0x2b8] sm:$0xff] %v670
                  %v672 = vld [vmem:[%s494 + $0x540] sm:$0xff]
                  %673 = vst [vmem:[%s495 + $0x2c0] sm:$0xff] %v672
                  %v674 = vld [vmem:[%s494 + $0x548] sm:$0xff]
                  %675 = vst [vmem:[%s495 + $0x2c8] sm:$0xff] %v674
                  %v676 = vld [vmem:[%s494 + $0x550] sm:$0xff]
                  %677 = vst [vmem:[%s495 + $0x2d0] sm:$0xff] %v676
                  %v678 = vld [vmem:[%s494 + $0x558] sm:$0xff]
                  %679 = vst [vmem:[%s495 + $0x2d8] sm:$0xff] %v678
                  %v680 = vld [vmem:[%s494 + $0x560] sm:$0xff]
                  %681 = vst [vmem:[%s495 + $0x2e0] sm:$0xff] %v680
                  %v682 = vld [vmem:[%s494 + $0x568] sm:$0xff]
                  %683 = vst [vmem:[%s495 + $0x2e8] sm:$0xff] %v682
                  %v684 = vld [vmem:[%s494 + $0x570] sm:$0xff]
                  %685 = vst [vmem:[%s495 + $0x2f0] sm:$0xff] %v684
                  %v686 = vld [vmem:[%s494 + $0x578] sm:$0xff]
                  %687 = vst [vmem:[%s495 + $0x2f8] sm:$0xff] %v686
                  %v688 = vld [vmem:[%s494 + $0x600] sm:$0xff]
                  %689 = vst [vmem:[%s495 + $0x300] sm:$0xff] %v688
                  %v690 = vld [vmem:[%s494 + $0x608] sm:$0xff]
                  %691 = vst [vmem:[%s495 + $0x308] sm:$0xff] %v690
                  %v692 = vld [vmem:[%s494 + $0x610] sm:$0xff]
                  %693 = vst [vmem:[%s495 + $0x310] sm:$0xff] %v692
                  %v694 = vld [vmem:[%s494 + $0x618] sm:$0xff]
                  %695 = vst [vmem:[%s495 + $0x318] sm:$0xff] %v694
                  %v696 = vld [vmem:[%s494 + $0x620] sm:$0xff]
                  %697 = vst [vmem:[%s495 + $0x320] sm:$0xff] %v696
                  %v698 = vld [vmem:[%s494 + $0x628] sm:$0xff]
                  %699 = vst [vmem:[%s495 + $0x328] sm:$0xff] %v698
                  %v700 = vld [vmem:[%s494 + $0x630] sm:$0xff]
                  %701 = vst [vmem:[%s495 + $0x330] sm:$0xff] %v700
                  %v702 = vld [vmem:[%s494 + $0x638] sm:$0xff]
                  %703 = vst [vmem:[%s495 + $0x338] sm:$0xff] %v702
                  %v704 = vld [vmem:[%s494 + $0x640] sm:$0xff]
                  %705 = vst [vmem:[%s495 + $0x340] sm:$0xff] %v704
                  %v706 = vld [vmem:[%s494 + $0x648] sm:$0xff]
                  %707 = vst [vmem:[%s495 + $0x348] sm:$0xff] %v706
                  %v708 = vld [vmem:[%s494 + $0x650] sm:$0xff]
                  %709 = vst [vmem:[%s495 + $0x350] sm:$0xff] %v708
                  %v710 = vld [vmem:[%s494 + $0x658] sm:$0xff]
                  %711 = vst [vmem:[%s495 + $0x358] sm:$0xff] %v710
                  %v712 = vld [vmem:[%s494 + $0x660] sm:$0xff]
                  %713 = vst [vmem:[%s495 + $0x360] sm:$0xff] %v712
                  %v714 = vld [vmem:[%s494 + $0x668] sm:$0xff]
                  %715 = vst [vmem:[%s495 + $0x368] sm:$0xff] %v714
                  %v716 = vld [vmem:[%s494 + $0x670] sm:$0xff]
                  %717 = vst [vmem:[%s495 + $0x370] sm:$0xff] %v716
                  %v718 = vld [vmem:[%s494 + $0x678] sm:$0xff]
                  %719 = vst [vmem:[%s495 + $0x378] sm:$0xff] %v718
                  %v720 = vld [vmem:[%s494 + $0x700] sm:$0xff]
                  %721 = vst [vmem:[%s495 + $0x380] sm:$0xff] %v720
                  %v722 = vld [vmem:[%s494 + $0x708] sm:$0xff]
                  %723 = vst [vmem:[%s495 + $0x388] sm:$0xff] %v722
                  %v724 = vld [vmem:[%s494 + $0x710] sm:$0xff]
                  %725 = vst [vmem:[%s495 + $0x390] sm:$0xff] %v724
                  %v726 = vld [vmem:[%s494 + $0x718] sm:$0xff]
                  %727 = vst [vmem:[%s495 + $0x398] sm:$0xff] %v726
                  %v728 = vld [vmem:[%s494 + $0x720] sm:$0xff]
                  %729 = vst [vmem:[%s495 + $0x3a0] sm:$0xff] %v728
                  %v730 = vld [vmem:[%s494 + $0x728] sm:$0xff]
                  %731 = vst [vmem:[%s495 + $0x3a8] sm:$0xff] %v730
                  %v732 = vld [vmem:[%s494 + $0x730] sm:$0xff]
                  %733 = vst [vmem:[%s495 + $0x3b0] sm:$0xff] %v732
                  %v734 = vld [vmem:[%s494 + $0x738] sm:$0xff]
                  %735 = vst [vmem:[%s495 + $0x3b8] sm:$0xff] %v734
                  %v736 = vld [vmem:[%s494 + $0x740] sm:$0xff]
                  %737 = vst [vmem:[%s495 + $0x3c0] sm:$0xff] %v736
                  %v738 = vld [vmem:[%s494 + $0x748] sm:$0xff]
                  %739 = vst [vmem:[%s495 + $0x3c8] sm:$0xff] %v738
                  %v740 = vld [vmem:[%s494 + $0x750] sm:$0xff]
                  %741 = vst [vmem:[%s495 + $0x3d0] sm:$0xff] %v740
                  %v742 = vld [vmem:[%s494 + $0x758] sm:$0xff]
                  %743 = vst [vmem:[%s495 + $0x3d8] sm:$0xff] %v742
                  %v744 = vld [vmem:[%s494 + $0x760] sm:$0xff]
                  %745 = vst [vmem:[%s495 + $0x3e0] sm:$0xff] %v744
                  %v746 = vld [vmem:[%s494 + $0x768] sm:$0xff]
                  %747 = vst [vmem:[%s495 + $0x3e8] sm:$0xff] %v746
                  %v748 = vld [vmem:[%s494 + $0x770] sm:$0xff]
                  %749 = vst [vmem:[%s495 + $0x3f0] sm:$0xff] %v748
                  %v750 = vld [vmem:[%s494 + $0x778] sm:$0xff]
                  %751 = vst [vmem:[%s495 + $0x3f8] sm:$0xff] %v750
                $region56: #{tpu_custom_call.1} parent=50 // loop_footer
                  %s493 = sadd.s32 1, %s489
                $region57: #{tpu_custom_call.1} parent=50 // loop_footer_branch
                  %488 = sbr.rel target = $region53
                $region58: #{tpu_custom_call.1} parent=50 // loop_exit
                  _
              $region51: #{tpu_custom_call.1} parent=35 // pred_fallthru
                _
              // Predicated region
              $region59: #{tpu_custom_call.1} parent=35 // pred_check
                _
              $region60: #{tpu_custom_call.1} parent=35 // pred_check_branch
                %753 = sbr.rel target = $region62
              $region61: #{tpu_custom_call.1} parent=35 // pred_region
                _
              $region62: #{tpu_custom_call.1} parent=35 // pred_fallthru
                _
            $region36: #{tpu_custom_call.1} parent=31 // pred_fallthru
              _
            // Predicated region
            $region37: #{tpu_custom_call.1} parent=31 // pred_check
              _
            $region38: #{tpu_custom_call.1} parent=31 // pred_check_branch
              %220 = sbr.rel target = $region40
            $region39: #{tpu_custom_call.1} parent=31 // pred_region
              loop: start=0, step=1, limit=1
              $region41: #{tpu_custom_call.1} parent=39 // loop_pre_header
                _
              $region42: #{tpu_custom_call.1} parent=39 // loop_header
                %s223 = sphi 0, %s227
                %p224 = scmp.ge.s32.totalorder %s223, 1
                %s228 = sphi %s214, %s214
                %s229 = sphi %s208, %s208
              $region43: #{tpu_custom_call.1} parent=39 // loop_header_branch
                %226 = sbr.rel (%p224) target = $region47
              $region44: #{tpu_custom_call.1} parent=39 // loop_body
                %v230 = vld [vmem:[%s228] sm:$0xff]
                %231 = vst [vmem:[%s229] sm:$0xff] %v230
                %v232 = vld [vmem:[%s228 + $0x8] sm:$0xff]
                %233 = vst [vmem:[%s229 + $0x8] sm:$0xff] %v232
                %v234 = vld [vmem:[%s228 + $0x10] sm:$0xff]
                %235 = vst [vmem:[%s229 + $0x10] sm:$0xff] %v234
                %v236 = vld [vmem:[%s228 + $0x18] sm:$0xff]
                %237 = vst [vmem:[%s229 + $0x18] sm:$0xff] %v236
                %v238 = vld [vmem:[%s228 + $0x20] sm:$0xff]
                %239 = vst [vmem:[%s229 + $0x20] sm:$0xff] %v238
                %v240 = vld [vmem:[%s228 + $0x28] sm:$0xff]
                %241 = vst [vmem:[%s229 + $0x28] sm:$0xff] %v240
                %v242 = vld [vmem:[%s228 + $0x30] sm:$0xff]
                %243 = vst [vmem:[%s229 + $0x30] sm:$0xff] %v242
                %v244 = vld [vmem:[%s228 + $0x38] sm:$0xff]
                %245 = vst [vmem:[%s229 + $0x38] sm:$0xff] %v244
                %v246 = vld [vmem:[%s228 + $0x40] sm:$0xff]
                %247 = vst [vmem:[%s229 + $0x40] sm:$0xff] %v246
                %v248 = vld [vmem:[%s228 + $0x48] sm:$0xff]
                %249 = vst [vmem:[%s229 + $0x48] sm:$0xff] %v248
                %v250 = vld [vmem:[%s228 + $0x50] sm:$0xff]
                %251 = vst [vmem:[%s229 + $0x50] sm:$0xff] %v250
                %v252 = vld [vmem:[%s228 + $0x58] sm:$0xff]
                %253 = vst [vmem:[%s229 + $0x58] sm:$0xff] %v252
                %v254 = vld [vmem:[%s228 + $0x60] sm:$0xff]
                %255 = vst [vmem:[%s229 + $0x60] sm:$0xff] %v254
                %v256 = vld [vmem:[%s228 + $0x68] sm:$0xff]
                %257 = vst [vmem:[%s229 + $0x68] sm:$0xff] %v256
                %v258 = vld [vmem:[%s228 + $0x70] sm:$0xff]
                %259 = vst [vmem:[%s229 + $0x70] sm:$0xff] %v258
                %v260 = vld [vmem:[%s228 + $0x78] sm:$0xff]
                %261 = vst [vmem:[%s229 + $0x78] sm:$0xff] %v260
                %v262 = vld [vmem:[%s228 + $0x100] sm:$0xff]
                %263 = vst [vmem:[%s229 + $0x80] sm:$0xff] %v262
                %v264 = vld [vmem:[%s228 + $0x108] sm:$0xff]
                %265 = vst [vmem:[%s229 + $0x88] sm:$0xff] %v264
                %v266 = vld [vmem:[%s228 + $0x110] sm:$0xff]
                %267 = vst [vmem:[%s229 + $0x90] sm:$0xff] %v266
                %v268 = vld [vmem:[%s228 + $0x118] sm:$0xff]
                %269 = vst [vmem:[%s229 + $0x98] sm:$0xff] %v268
                %v270 = vld [vmem:[%s228 + $0x120] sm:$0xff]
                %271 = vst [vmem:[%s229 + $0xa0] sm:$0xff] %v270
                %v272 = vld [vmem:[%s228 + $0x128] sm:$0xff]
                %273 = vst [vmem:[%s229 + $0xa8] sm:$0xff] %v272
                %v274 = vld [vmem:[%s228 + $0x130] sm:$0xff]
                %275 = vst [vmem:[%s229 + $0xb0] sm:$0xff] %v274
                %v276 = vld [vmem:[%s228 + $0x138] sm:$0xff]
                %277 = vst [vmem:[%s229 + $0xb8] sm:$0xff] %v276
                %v278 = vld [vmem:[%s228 + $0x140] sm:$0xff]
                %279 = vst [vmem:[%s229 + $0xc0] sm:$0xff] %v278
                %v280 = vld [vmem:[%s228 + $0x148] sm:$0xff]
                %281 = vst [vmem:[%s229 + $0xc8] sm:$0xff] %v280
                %v282 = vld [vmem:[%s228 + $0x150] sm:$0xff]
                %283 = vst [vmem:[%s229 + $0xd0] sm:$0xff] %v282
                %v284 = vld [vmem:[%s228 + $0x158] sm:$0xff]
                %285 = vst [vmem:[%s229 + $0xd8] sm:$0xff] %v284
                %v286 = vld [vmem:[%s228 + $0x160] sm:$0xff]
                %287 = vst [vmem:[%s229 + $0xe0] sm:$0xff] %v286
                %v288 = vld [vmem:[%s228 + $0x168] sm:$0xff]
                %289 = vst [vmem:[%s229 + $0xe8] sm:$0xff] %v288
                %v290 = vld [vmem:[%s228 + $0x170] sm:$0xff]
                %291 = vst [vmem:[%s229 + $0xf0] sm:$0xff] %v290
                %v292 = vld [vmem:[%s228 + $0x178] sm:$0xff]
                %293 = vst [vmem:[%s229 + $0xf8] sm:$0xff] %v292
                %v294 = vld [vmem:[%s228 + $0x200] sm:$0xff]
                %295 = vst [vmem:[%s229 + $0x100] sm:$0xff] %v294
                %v296 = vld [vmem:[%s228 + $0x208] sm:$0xff]
                %297 = vst [vmem:[%s229 + $0x108] sm:$0xff] %v296
                %v298 = vld [vmem:[%s228 + $0x210] sm:$0xff]
                %299 = vst [vmem:[%s229 + $0x110] sm:$0xff] %v298
                %v300 = vld [vmem:[%s228 + $0x218] sm:$0xff]
                %301 = vst [vmem:[%s229 + $0x118] sm:$0xff] %v300
                %v302 = vld [vmem:[%s228 + $0x220] sm:$0xff]
                %303 = vst [vmem:[%s229 + $0x120] sm:$0xff] %v302
                %v304 = vld [vmem:[%s228 + $0x228] sm:$0xff]
                %305 = vst [vmem:[%s229 + $0x128] sm:$0xff] %v304
                %v306 = vld [vmem:[%s228 + $0x230] sm:$0xff]
                %307 = vst [vmem:[%s229 + $0x130] sm:$0xff] %v306
                %v308 = vld [vmem:[%s228 + $0x238] sm:$0xff]
                %309 = vst [vmem:[%s229 + $0x138] sm:$0xff] %v308
                %v310 = vld [vmem:[%s228 + $0x240] sm:$0xff]
                %311 = vst [vmem:[%s229 + $0x140] sm:$0xff] %v310
                %v312 = vld [vmem:[%s228 + $0x248] sm:$0xff]
                %313 = vst [vmem:[%s229 + $0x148] sm:$0xff] %v312
                %v314 = vld [vmem:[%s228 + $0x250] sm:$0xff]
                %315 = vst [vmem:[%s229 + $0x150] sm:$0xff] %v314
                %v316 = vld [vmem:[%s228 + $0x258] sm:$0xff]
                %317 = vst [vmem:[%s229 + $0x158] sm:$0xff] %v316
                %v318 = vld [vmem:[%s228 + $0x260] sm:$0xff]
                %319 = vst [vmem:[%s229 + $0x160] sm:$0xff] %v318
                %v320 = vld [vmem:[%s228 + $0x268] sm:$0xff]
                %321 = vst [vmem:[%s229 + $0x168] sm:$0xff] %v320
                %v322 = vld [vmem:[%s228 + $0x270] sm:$0xff]
                %323 = vst [vmem:[%s229 + $0x170] sm:$0xff] %v322
                %v324 = vld [vmem:[%s228 + $0x278] sm:$0xff]
                %325 = vst [vmem:[%s229 + $0x178] sm:$0xff] %v324
                %v326 = vld [vmem:[%s228 + $0x300] sm:$0xff]
                %327 = vst [vmem:[%s229 + $0x180] sm:$0xff] %v326
                %v328 = vld [vmem:[%s228 + $0x308] sm:$0xff]
                %329 = vst [vmem:[%s229 + $0x188] sm:$0xff] %v328
                %v330 = vld [vmem:[%s228 + $0x310] sm:$0xff]
                %331 = vst [vmem:[%s229 + $0x190] sm:$0xff] %v330
                %v332 = vld [vmem:[%s228 + $0x318] sm:$0xff]
                %333 = vst [vmem:[%s229 + $0x198] sm:$0xff] %v332
                %v334 = vld [vmem:[%s228 + $0x320] sm:$0xff]
                %335 = vst [vmem:[%s229 + $0x1a0] sm:$0xff] %v334
                %v336 = vld [vmem:[%s228 + $0x328] sm:$0xff]
                %337 = vst [vmem:[%s229 + $0x1a8] sm:$0xff] %v336
                %v338 = vld [vmem:[%s228 + $0x330] sm:$0xff]
                %339 = vst [vmem:[%s229 + $0x1b0] sm:$0xff] %v338
                %v340 = vld [vmem:[%s228 + $0x338] sm:$0xff]
                %341 = vst [vmem:[%s229 + $0x1b8] sm:$0xff] %v340
                %v342 = vld [vmem:[%s228 + $0x340] sm:$0xff]
                %343 = vst [vmem:[%s229 + $0x1c0] sm:$0xff] %v342
                %v344 = vld [vmem:[%s228 + $0x348] sm:$0xff]
                %345 = vst [vmem:[%s229 + $0x1c8] sm:$0xff] %v344
                %v346 = vld [vmem:[%s228 + $0x350] sm:$0xff]
                %347 = vst [vmem:[%s229 + $0x1d0] sm:$0xff] %v346
                %v348 = vld [vmem:[%s228 + $0x358] sm:$0xff]
                %349 = vst [vmem:[%s229 + $0x1d8] sm:$0xff] %v348
                %v350 = vld [vmem:[%s228 + $0x360] sm:$0xff]
                %351 = vst [vmem:[%s229 + $0x1e0] sm:$0xff] %v350
                %v352 = vld [vmem:[%s228 + $0x368] sm:$0xff]
                %353 = vst [vmem:[%s229 + $0x1e8] sm:$0xff] %v352
                %v354 = vld [vmem:[%s228 + $0x370] sm:$0xff]
                %355 = vst [vmem:[%s229 + $0x1f0] sm:$0xff] %v354
                %v356 = vld [vmem:[%s228 + $0x378] sm:$0xff]
                %357 = vst [vmem:[%s229 + $0x1f8] sm:$0xff] %v356
                %v358 = vld [vmem:[%s228 + $0x400] sm:$0xff]
                %359 = vst [vmem:[%s229 + $0x200] sm:$0xff] %v358
                %v360 = vld [vmem:[%s228 + $0x408] sm:$0xff]
                %361 = vst [vmem:[%s229 + $0x208] sm:$0xff] %v360
                %v362 = vld [vmem:[%s228 + $0x410] sm:$0xff]
                %363 = vst [vmem:[%s229 + $0x210] sm:$0xff] %v362
                %v364 = vld [vmem:[%s228 + $0x418] sm:$0xff]
                %365 = vst [vmem:[%s229 + $0x218] sm:$0xff] %v364
                %v366 = vld [vmem:[%s228 + $0x420] sm:$0xff]
                %367 = vst [vmem:[%s229 + $0x220] sm:$0xff] %v366
                %v368 = vld [vmem:[%s228 + $0x428] sm:$0xff]
                %369 = vst [vmem:[%s229 + $0x228] sm:$0xff] %v368
                %v370 = vld [vmem:[%s228 + $0x430] sm:$0xff]
                %371 = vst [vmem:[%s229 + $0x230] sm:$0xff] %v370
                %v372 = vld [vmem:[%s228 + $0x438] sm:$0xff]
                %373 = vst [vmem:[%s229 + $0x238] sm:$0xff] %v372
                %v374 = vld [vmem:[%s228 + $0x440] sm:$0xff]
                %375 = vst [vmem:[%s229 + $0x240] sm:$0xff] %v374
                %v376 = vld [vmem:[%s228 + $0x448] sm:$0xff]
                %377 = vst [vmem:[%s229 + $0x248] sm:$0xff] %v376
                %v378 = vld [vmem:[%s228 + $0x450] sm:$0xff]
                %379 = vst [vmem:[%s229 + $0x250] sm:$0xff] %v378
                %v380 = vld [vmem:[%s228 + $0x458] sm:$0xff]
                %381 = vst [vmem:[%s229 + $0x258] sm:$0xff] %v380
                %v382 = vld [vmem:[%s228 + $0x460] sm:$0xff]
                %383 = vst [vmem:[%s229 + $0x260] sm:$0xff] %v382
                %v384 = vld [vmem:[%s228 + $0x468] sm:$0xff]
                %385 = vst [vmem:[%s229 + $0x268] sm:$0xff] %v384
                %v386 = vld [vmem:[%s228 + $0x470] sm:$0xff]
                %387 = vst [vmem:[%s229 + $0x270] sm:$0xff] %v386
                %v388 = vld [vmem:[%s228 + $0x478] sm:$0xff]
                %389 = vst [vmem:[%s229 + $0x278] sm:$0xff] %v388
                %v390 = vld [vmem:[%s228 + $0x500] sm:$0xff]
                %391 = vst [vmem:[%s229 + $0x280] sm:$0xff] %v390
                %v392 = vld [vmem:[%s228 + $0x508] sm:$0xff]
                %393 = vst [vmem:[%s229 + $0x288] sm:$0xff] %v392
                %v394 = vld [vmem:[%s228 + $0x510] sm:$0xff]
                %395 = vst [vmem:[%s229 + $0x290] sm:$0xff] %v394
                %v396 = vld [vmem:[%s228 + $0x518] sm:$0xff]
                %397 = vst [vmem:[%s229 + $0x298] sm:$0xff] %v396
                %v398 = vld [vmem:[%s228 + $0x520] sm:$0xff]
                %399 = vst [vmem:[%s229 + $0x2a0] sm:$0xff] %v398
                %v400 = vld [vmem:[%s228 + $0x528] sm:$0xff]
                %401 = vst [vmem:[%s229 + $0x2a8] sm:$0xff] %v400
                %v402 = vld [vmem:[%s228 + $0x530] sm:$0xff]
                %403 = vst [vmem:[%s229 + $0x2b0] sm:$0xff] %v402
                %v404 = vld [vmem:[%s228 + $0x538] sm:$0xff]
                %405 = vst [vmem:[%s229 + $0x2b8] sm:$0xff] %v404
                %v406 = vld [vmem:[%s228 + $0x540] sm:$0xff]
                %407 = vst [vmem:[%s229 + $0x2c0] sm:$0xff] %v406
                %v408 = vld [vmem:[%s228 + $0x548] sm:$0xff]
                %409 = vst [vmem:[%s229 + $0x2c8] sm:$0xff] %v408
                %v410 = vld [vmem:[%s228 + $0x550] sm:$0xff]
                %411 = vst [vmem:[%s229 + $0x2d0] sm:$0xff] %v410
                %v412 = vld [vmem:[%s228 + $0x558] sm:$0xff]
                %413 = vst [vmem:[%s229 + $0x2d8] sm:$0xff] %v412
                %v414 = vld [vmem:[%s228 + $0x560] sm:$0xff]
                %415 = vst [vmem:[%s229 + $0x2e0] sm:$0xff] %v414
                %v416 = vld [vmem:[%s228 + $0x568] sm:$0xff]
                %417 = vst [vmem:[%s229 + $0x2e8] sm:$0xff] %v416
                %v418 = vld [vmem:[%s228 + $0x570] sm:$0xff]
                %419 = vst [vmem:[%s229 + $0x2f0] sm:$0xff] %v418
                %v420 = vld [vmem:[%s228 + $0x578] sm:$0xff]
                %421 = vst [vmem:[%s229 + $0x2f8] sm:$0xff] %v420
                %v422 = vld [vmem:[%s228 + $0x600] sm:$0xff]
                %423 = vst [vmem:[%s229 + $0x300] sm:$0xff] %v422
                %v424 = vld [vmem:[%s228 + $0x608] sm:$0xff]
                %425 = vst [vmem:[%s229 + $0x308] sm:$0xff] %v424
                %v426 = vld [vmem:[%s228 + $0x610] sm:$0xff]
                %427 = vst [vmem:[%s229 + $0x310] sm:$0xff] %v426
                %v428 = vld [vmem:[%s228 + $0x618] sm:$0xff]
                %429 = vst [vmem:[%s229 + $0x318] sm:$0xff] %v428
                %v430 = vld [vmem:[%s228 + $0x620] sm:$0xff]
                %431 = vst [vmem:[%s229 + $0x320] sm:$0xff] %v430
                %v432 = vld [vmem:[%s228 + $0x628] sm:$0xff]
                %433 = vst [vmem:[%s229 + $0x328] sm:$0xff] %v432
                %v434 = vld [vmem:[%s228 + $0x630] sm:$0xff]
                %435 = vst [vmem:[%s229 + $0x330] sm:$0xff] %v434
                %v436 = vld [vmem:[%s228 + $0x638] sm:$0xff]
                %437 = vst [vmem:[%s229 + $0x338] sm:$0xff] %v436
                %v438 = vld [vmem:[%s228 + $0x640] sm:$0xff]
                %439 = vst [vmem:[%s229 + $0x340] sm:$0xff] %v438
                %v440 = vld [vmem:[%s228 + $0x648] sm:$0xff]
                %441 = vst [vmem:[%s229 + $0x348] sm:$0xff] %v440
                %v442 = vld [vmem:[%s228 + $0x650] sm:$0xff]
                %443 = vst [vmem:[%s229 + $0x350] sm:$0xff] %v442
                %v444 = vld [vmem:[%s228 + $0x658] sm:$0xff]
                %445 = vst [vmem:[%s229 + $0x358] sm:$0xff] %v444
                %v446 = vld [vmem:[%s228 + $0x660] sm:$0xff]
                %447 = vst [vmem:[%s229 + $0x360] sm:$0xff] %v446
                %v448 = vld [vmem:[%s228 + $0x668] sm:$0xff]
                %449 = vst [vmem:[%s229 + $0x368] sm:$0xff] %v448
                %v450 = vld [vmem:[%s228 + $0x670] sm:$0xff]
                %451 = vst [vmem:[%s229 + $0x370] sm:$0xff] %v450
                %v452 = vld [vmem:[%s228 + $0x678] sm:$0xff]
                %453 = vst [vmem:[%s229 + $0x378] sm:$0xff] %v452
                %v454 = vld [vmem:[%s228 + $0x700] sm:$0xff]
                %455 = vst [vmem:[%s229 + $0x380] sm:$0xff] %v454
                %v456 = vld [vmem:[%s228 + $0x708] sm:$0xff]
                %457 = vst [vmem:[%s229 + $0x388] sm:$0xff] %v456
                %v458 = vld [vmem:[%s228 + $0x710] sm:$0xff]
                %459 = vst [vmem:[%s229 + $0x390] sm:$0xff] %v458
                %v460 = vld [vmem:[%s228 + $0x718] sm:$0xff]
                %461 = vst [vmem:[%s229 + $0x398] sm:$0xff] %v460
                %v462 = vld [vmem:[%s228 + $0x720] sm:$0xff]
                %463 = vst [vmem:[%s229 + $0x3a0] sm:$0xff] %v462
                %v464 = vld [vmem:[%s228 + $0x728] sm:$0xff]
                %465 = vst [vmem:[%s229 + $0x3a8] sm:$0xff] %v464
                %v466 = vld [vmem:[%s228 + $0x730] sm:$0xff]
                %467 = vst [vmem:[%s229 + $0x3b0] sm:$0xff] %v466
                %v468 = vld [vmem:[%s228 + $0x738] sm:$0xff]
                %469 = vst [vmem:[%s229 + $0x3b8] sm:$0xff] %v468
                %v470 = vld [vmem:[%s228 + $0x740] sm:$0xff]
                %471 = vst [vmem:[%s229 + $0x3c0] sm:$0xff] %v470
                %v472 = vld [vmem:[%s228 + $0x748] sm:$0xff]
                %473 = vst [vmem:[%s229 + $0x3c8] sm:$0xff] %v472
                %v474 = vld [vmem:[%s228 + $0x750] sm:$0xff]
                %475 = vst [vmem:[%s229 + $0x3d0] sm:$0xff] %v474
                %v476 = vld [vmem:[%s228 + $0x758] sm:$0xff]
                %477 = vst [vmem:[%s229 + $0x3d8] sm:$0xff] %v476
                %v478 = vld [vmem:[%s228 + $0x760] sm:$0xff]
                %479 = vst [vmem:[%s229 + $0x3e0] sm:$0xff] %v478
                %v480 = vld [vmem:[%s228 + $0x768] sm:$0xff]
                %481 = vst [vmem:[%s229 + $0x3e8] sm:$0xff] %v480
                %v482 = vld [vmem:[%s228 + $0x770] sm:$0xff]
                %483 = vst [vmem:[%s229 + $0x3f0] sm:$0xff] %v482
                %v484 = vld [vmem:[%s228 + $0x778] sm:$0xff]
                %485 = vst [vmem:[%s229 + $0x3f8] sm:$0xff] %v484
              $region45: #{tpu_custom_call.1} parent=39 // loop_footer
                %s227 = sadd.s32 1, %s223
              $region46: #{tpu_custom_call.1} parent=39 // loop_footer_branch
                %222 = sbr.rel target = $region42
              $region47: #{tpu_custom_call.1} parent=39 // loop_exit
                _
            $region40: #{tpu_custom_call.1} parent=31 // pred_fallthru
              _
          $region32: #{tpu_custom_call.1} parent=27 // pred_fallthru
            _
          %754 = vnop
        $region28: #{tpu_custom_call.1} parent=23 // pred_fallthru
          _
        // Predicated region
        $region63: #{tpu_custom_call.1} parent=23 // pred_check
          %p755 = pneg %p77
        $region64: #{tpu_custom_call.1} parent=23 // pred_check_branch
          %757 = sbr.rel (%p755) target = $region66
        $region65: #{tpu_custom_call.1} parent=23 // pred_region
          %s758 = sand.u32 %s67, 1
          %s759 = sand.u32 %s67, 1
          %s760 = smul.addr %s759, 8
          %s761 = scalar_lea.vmem [#allocation5], %s760
          %s762 = smul.u32 8, %s22
          %s763 = smul.addr %s762, 2
          %s764 = sadd.s32 %s23, %s763
          %s765 = scalar_lea.vmem %s1, %s764
          // Predicated region
          $region67: #{tpu_custom_call.1} parent=65 // pred_check
            _
          $region68: #{tpu_custom_call.1} parent=65 // pred_check_branch
            %767 = sbr.rel (0) target = $region70
          $region69: #{tpu_custom_call.1} parent=65 // pred_region
            // Predicated region
            $region71: #{tpu_custom_call.1} parent=69 // pred_check
              _
            $region72: #{tpu_custom_call.1} parent=69 // pred_check_branch
              %769 = sbr.rel target = $region74
            $region73: #{tpu_custom_call.1} parent=69 // pred_region
              // Predicated region
              $region86: #{tpu_custom_call.1} parent=73 // pred_check
                _
              $region87: #{tpu_custom_call.1} parent=73 // pred_check_branch
                %798 = sbr.rel (0) target = $region89
              $region88: #{tpu_custom_call.1} parent=73 // pred_region
                loop: start=0, step=1, limit=1
                $region90: #{tpu_custom_call.1} parent=88 // loop_pre_header
                  _
                $region91: #{tpu_custom_call.1} parent=88 // loop_header
                  %s800 = sphi 0, %s804
                  %p801 = scmp.ge.s32.totalorder %s800, 1
                  %s805 = sphi %s765, %s765
                  %s806 = sphi %s761, %s761
                $region92: #{tpu_custom_call.1} parent=88 // loop_header_branch
                  %803 = sbr.rel (%p801) target = $region96
                $region93: #{tpu_custom_call.1} parent=88 // loop_body
                  _
                $region94: #{tpu_custom_call.1} parent=88 // loop_footer
                  %s804 = sadd.s32 1, %s800
                $region95: #{tpu_custom_call.1} parent=88 // loop_footer_branch
                  %799 = sbr.rel target = $region91
                $region96: #{tpu_custom_call.1} parent=88 // loop_exit
                  _
                loop: start=0, step=1, limit=1
                $region97: #{tpu_custom_call.1} parent=88 // loop_pre_header
                  _
                $region98: #{tpu_custom_call.1} parent=88 // loop_header
                  %s809 = sphi 0, %s813
                  %p810 = scmp.ge.s32.totalorder %s809, 1
                  %s814 = sphi %s765, %s765
                  %s815 = sphi %s761, %s761
                $region99: #{tpu_custom_call.1} parent=88 // loop_header_branch
                  %812 = sbr.rel (%p810) target = $region103
                $region100: #{tpu_custom_call.1} parent=88 // loop_body
                  %v816 = vld [vmem:[%s814] sm:$0x1]
                  %817 = vst [vmem:[%s815] sm:$0x1] %v816
                  %v818 = vld [vmem:[%s814 + $0x2] sm:$0x1]
                  %819 = vst [vmem:[%s815 + $0x1] sm:$0x1] %v818
                  %v820 = vld [vmem:[%s814 + $0x4] sm:$0x1]
                  %821 = vst [vmem:[%s815 + $0x2] sm:$0x1] %v820
                  %v822 = vld [vmem:[%s814 + $0x6] sm:$0x1]
                  %823 = vst [vmem:[%s815 + $0x3] sm:$0x1] %v822
                  %v824 = vld [vmem:[%s814 + $0x8] sm:$0x1]
                  %825 = vst [vmem:[%s815 + $0x4] sm:$0x1] %v824
                  %v826 = vld [vmem:[%s814 + $0xa] sm:$0x1]
                  %827 = vst [vmem:[%s815 + $0x5] sm:$0x1] %v826
                  %v828 = vld [vmem:[%s814 + $0xc] sm:$0x1]
                  %829 = vst [vmem:[%s815 + $0x6] sm:$0x1] %v828
                  %v830 = vld [vmem:[%s814 + $0xe] sm:$0x1]
                  %831 = vst [vmem:[%s815 + $0x7] sm:$0x1] %v830
                $region101: #{tpu_custom_call.1} parent=88 // loop_footer
                  %s813 = sadd.s32 1, %s809
                $region102: #{tpu_custom_call.1} parent=88 // loop_footer_branch
                  %808 = sbr.rel target = $region98
                $region103: #{tpu_custom_call.1} parent=88 // loop_exit
                  _
              $region89: #{tpu_custom_call.1} parent=73 // pred_fallthru
                _
            $region74: #{tpu_custom_call.1} parent=69 // pred_fallthru
              _
            // Predicated region
            $region75: #{tpu_custom_call.1} parent=69 // pred_check
              _
            $region76: #{tpu_custom_call.1} parent=69 // pred_check_branch
              %771 = sbr.rel (0) target = $region78
            $region77: #{tpu_custom_call.1} parent=69 // pred_region
              loop: start=0, step=1, limit=1
              $region79: #{tpu_custom_call.1} parent=77 // loop_pre_header
                _
              $region80: #{tpu_custom_call.1} parent=77 // loop_header
                %s774 = sphi 0, %s778
                %p775 = scmp.ge.s32.totalorder %s774, 1
                %s779 = sphi %s765, %s765
                %s780 = sphi %s761, %s761
              $region81: #{tpu_custom_call.1} parent=77 // loop_header_branch
                %777 = sbr.rel (%p775) target = $region85
              $region82: #{tpu_custom_call.1} parent=77 // loop_body
                %v781 = vld [vmem:[%s779] sm:$0x1]
                %782 = vst [vmem:[%s780] sm:$0x1] %v781
                %v783 = vld [vmem:[%s779 + $0x2] sm:$0x1]
                %784 = vst [vmem:[%s780 + $0x1] sm:$0x1] %v783
                %v785 = vld [vmem:[%s779 + $0x4] sm:$0x1]
                %786 = vst [vmem:[%s780 + $0x2] sm:$0x1] %v785
                %v787 = vld [vmem:[%s779 + $0x6] sm:$0x1]
                %788 = vst [vmem:[%s780 + $0x3] sm:$0x1] %v787
                %v789 = vld [vmem:[%s779 + $0x8] sm:$0x1]
                %790 = vst [vmem:[%s780 + $0x4] sm:$0x1] %v789
                %v791 = vld [vmem:[%s779 + $0xa] sm:$0x1]
                %792 = vst [vmem:[%s780 + $0x5] sm:$0x1] %v791
                %v793 = vld [vmem:[%s779 + $0xc] sm:$0x1]
                %794 = vst [vmem:[%s780 + $0x6] sm:$0x1] %v793
                %v795 = vld [vmem:[%s779 + $0xe] sm:$0x1]
                %796 = vst [vmem:[%s780 + $0x7] sm:$0x1] %v795
              $region83: #{tpu_custom_call.1} parent=77 // loop_footer
                %s778 = sadd.s32 1, %s774
              $region84: #{tpu_custom_call.1} parent=77 // loop_footer_branch
                %773 = sbr.rel target = $region80
              $region85: #{tpu_custom_call.1} parent=77 // loop_exit
                _
            $region78: #{tpu_custom_call.1} parent=69 // pred_fallthru
              _
          $region70: #{tpu_custom_call.1} parent=65 // pred_fallthru
            _
          %832 = vnop
        $region66: #{tpu_custom_call.1} parent=23 // pred_fallthru
          _
        // Predicated region
        $region104: #{tpu_custom_call.1} parent=23 // pred_check
          %p833 = pneg %p103
        $region105: #{tpu_custom_call.1} parent=23 // pred_check_branch
          %835 = sbr.rel (%p833) target = $region107
        $region106: #{tpu_custom_call.1} parent=23 // pred_region
          %p836 = scmp.lt.s32.totalorder %s22, 1
          %s837 = scalar_select %p836, %s22, 1
          %s838 = scalar_lea.vmem %s2, %s837
        $region107: #{tpu_custom_call.1} parent=23 // pred_fallthru
          _
      $region24: #{tpu_custom_call.1} parent=5 // pred_fallthru
        _
      %p839 = scmp.le.s32.totalorder 1, %s15
      %p840 = scmp.lt.s32.totalorder %s15, 5
      %p841 = pnand %p839, %p840
      %p842 = pneg %p841
      // Predicated region
      $region108: #{tpu_custom_call.1} parent=5 // pred_check
        _
      $region109: #{tpu_custom_call.1} parent=5 // pred_check_branch
        %844 = sbr.rel (%p841) target = $region111
      $region110: #{tpu_custom_call.1} parent=5 // pred_region
        %s845 = ssub.s32 %s15, 1
        %s846 = sand.u32 %s42, 1
        %s847 = sand.u32 %s42, 1
        %s848 = smul.addr %s847, 1024
        %s849 = scalar_lea.vmem [#allocation4], %s848
        // Predicated region
        $region112: #{tpu_custom_call.1} parent=110 // pred_check
          %p850 = pneg %p55
        $region113: #{tpu_custom_call.1} parent=110 // pred_check_branch
          %852 = sbr.rel (%p850) target = $region115
        $region114: #{tpu_custom_call.1} parent=110 // pred_region
          _
        $region115: #{tpu_custom_call.1} parent=110 // pred_fallthru
          _
        %s853 = sand.u32 %s70, 1
        %s854 = sand.u32 %s70, 1
        %s855 = smul.addr %s854, 8
        %s856 = scalar_lea.vmem [#allocation5], %s855
        // Predicated region
        $region116: #{tpu_custom_call.1} parent=110 // pred_check
          %p857 = pneg %p83
        $region117: #{tpu_custom_call.1} parent=110 // pred_check_branch
          %859 = sbr.rel (%p857) target = $region119
        $region118: #{tpu_custom_call.1} parent=110 // pred_region
          _
        $region119: #{tpu_custom_call.1} parent=110 // pred_fallthru
          _
        %s860 = sand.u32 %s42, 1
        %s861 = sand.u32 %s42, 1
        %s862 = smul.addr %s861, 1024
        %s863 = scalar_lea.vmem [#allocation4], %s862
        %p864 = pneg %p55
        %p865 = pneg %p52
        %s866 = sand.u32 %s70, 1
        %s867 = sand.u32 %s70, 1
        %s868 = smul.addr %s867, 8
        %s869 = scalar_lea.vmem [#allocation5], %s868
        %p870 = pneg %p83
        %p871 = pneg %p80
        %p872 = scmp.lt.s32.totalorder %s24, 1
        %s873 = scalar_select %p872, %s24, 1
        %s874 = scalar_lea.vmem %s2, %s873
        %p875 = pneg %p109
        %p876 = pneg %p106
        %p877 = pneg %p130
        %p878 = pneg %p127
        %p879 = pneg %p151
        %p880 = pneg %p148
        %p881 = pneg %p177
        %p882 = pneg %p174
        %s883 = sand.u32 %s164, 1
        %s884 = scalar_lea.sflag [#allocation7], %s883
        %s885 = sand.u32 %s164, 1
        %s886 = scalar_lea.vmem [#allocation6], %s885
        %s887 = smul.u32 8, %s24
        %s888 = smul.u32 16, %s25
        %s889 = smul.u32 8, %s24
        %p890 = scmp.lt.s32.totalorder %s24, 1
        %s891 = scalar_select %p890, %s24, 1
        %s892 = scalar_lea.vmem %s2, %s891
        %p893 = scmp.eq.s32.totalorder %s25, 0
        // Predicated region
        $region120: #{tpu_custom_call.1} parent=110 // pred_check
          %p894 = pneg %p893
        $region121: #{tpu_custom_call.1} parent=110 // pred_check_branch
          %896 = sbr.rel (%p894) target = $region123
        $region122: #{tpu_custom_call.1} parent=110 // pred_region
          %vm897 = vcmask 516096
          %898 = vst.msk [vmem:[#allocation2] sm:$0x1] %vm897, 0.0
          %899 = vst.msk [vmem:[#allocation2 + $0x1] sm:$0x1] %vm897, 0.0
          %900 = vst.msk [vmem:[#allocation2 + $0x2] sm:$0x1] %vm897, 0.0
          %901 = vst.msk [vmem:[#allocation2 + $0x3] sm:$0x1] %vm897, 0.0
          %902 = vst.msk [vmem:[#allocation2 + $0x4] sm:$0x1] %vm897, 0.0
          %903 = vst.msk [vmem:[#allocation2 + $0x5] sm:$0x1] %vm897, 0.0
          %904 = vst.msk [vmem:[#allocation2 + $0x6] sm:$0x1] %vm897, 0.0
          %905 = vst.msk [vmem:[#allocation2 + $0x7] sm:$0x1] %vm897, 0.0
        $region123: #{tpu_custom_call.1} parent=110 // pred_fallthru
          _
        %v906 = vld [vmem:[#allocation2] sm:$0x1]
        %v907 = vld [vmem:[#allocation2 + $0x1] sm:$0x1]
        %v908 = vld [vmem:[#allocation2 + $0x2] sm:$0x1]
        %v909 = vld [vmem:[#allocation2 + $0x3] sm:$0x1]
        %v910 = vld [vmem:[#allocation2 + $0x4] sm:$0x1]
        %v911 = vld [vmem:[#allocation2 + $0x5] sm:$0x1]
        %v912 = vld [vmem:[#allocation2 + $0x6] sm:$0x1]
        %v913 = vld [vmem:[#allocation2 + $0x7] sm:$0x1]
        %v914 = vld [vmem:[%s856] sm:$0x1]
        %v915 = vld [vmem:[%s856 + $0x1] sm:$0x1]
        %v916 = vld [vmem:[%s856 + $0x2] sm:$0x1]
        %v917 = vld [vmem:[%s856 + $0x3] sm:$0x1]
        %v918 = vld [vmem:[%s856 + $0x4] sm:$0x1]
        %v919 = vld [vmem:[%s856 + $0x5] sm:$0x1]
        %v920 = vld [vmem:[%s856 + $0x6] sm:$0x1]
        %v921 = vld [vmem:[%s856 + $0x7] sm:$0x1]
        %v922 = vld [vmem:[%s849] sm:$0xff]
        %v923 = vld [vmem:[%s849 + $0x8] sm:$0xff]
        %v924 = vld [vmem:[%s849 + $0x10] sm:$0xff]
        %v925 = vld [vmem:[%s849 + $0x18] sm:$0xff]
        %v926 = vld [vmem:[%s849 + $0x20] sm:$0xff]
        %v927 = vld [vmem:[%s849 + $0x28] sm:$0xff]
        %v928 = vld [vmem:[%s849 + $0x30] sm:$0xff]
        %v929 = vld [vmem:[%s849 + $0x38] sm:$0xff]
        %v930 = vld [vmem:[%s849 + $0x40] sm:$0xff]
        %v931 = vld [vmem:[%s849 + $0x48] sm:$0xff]
        %v932 = vld [vmem:[%s849 + $0x50] sm:$0xff]
        %v933 = vld [vmem:[%s849 + $0x58] sm:$0xff]
        %v934 = vld [vmem:[%s849 + $0x60] sm:$0xff]
        %v935 = vld [vmem:[%s849 + $0x68] sm:$0xff]
        %v936 = vld [vmem:[%s849 + $0x70] sm:$0xff]
        %v937 = vld [vmem:[%s849 + $0x78] sm:$0xff]
        %v938 = vld [vmem:[%s849 + $0x80] sm:$0xff]
        %v939 = vld [vmem:[%s849 + $0x88] sm:$0xff]
        %v940 = vld [vmem:[%s849 + $0x90] sm:$0xff]
        %v941 = vld [vmem:[%s849 + $0x98] sm:$0xff]
        %v942 = vld [vmem:[%s849 + $0xa0] sm:$0xff]
        %v943 = vld [vmem:[%s849 + $0xa8] sm:$0xff]
        %v944 = vld [vmem:[%s849 + $0xb0] sm:$0xff]
        %v945 = vld [vmem:[%s849 + $0xb8] sm:$0xff]
        %v946 = vld [vmem:[%s849 + $0xc0] sm:$0xff]
        %v947 = vld [vmem:[%s849 + $0xc8] sm:$0xff]
        %v948 = vld [vmem:[%s849 + $0xd0] sm:$0xff]
        %v949 = vld [vmem:[%s849 + $0xd8] sm:$0xff]
        %v950 = vld [vmem:[%s849 + $0xe0] sm:$0xff]
        %v951 = vld [vmem:[%s849 + $0xe8] sm:$0xff]
        %v952 = vld [vmem:[%s849 + $0xf0] sm:$0xff]
        %v953 = vld [vmem:[%s849 + $0xf8] sm:$0xff]
        %v954 = vld [vmem:[%s849 + $0x100] sm:$0xff]
        %v955 = vld [vmem:[%s849 + $0x108] sm:$0xff]
        %v956 = vld [vmem:[%s849 + $0x110] sm:$0xff]
        %v957 = vld [vmem:[%s849 + $0x118] sm:$0xff]
        %v958 = vld [vmem:[%s849 + $0x120] sm:$0xff]
        %v959 = vld [vmem:[%s849 + $0x128] sm:$0xff]
        %v960 = vld [vmem:[%s849 + $0x130] sm:$0xff]
        %v961 = vld [vmem:[%s849 + $0x138] sm:$0xff]
        %v962 = vld [vmem:[%s849 + $0x140] sm:$0xff]
        %v963 = vld [vmem:[%s849 + $0x148] sm:$0xff]
        %v964 = vld [vmem:[%s849 + $0x150] sm:$0xff]
        %v965 = vld [vmem:[%s849 + $0x158] sm:$0xff]
        %v966 = vld [vmem:[%s849 + $0x160] sm:$0xff]
        %v967 = vld [vmem:[%s849 + $0x168] sm:$0xff]
        %v968 = vld [vmem:[%s849 + $0x170] sm:$0xff]
        %v969 = vld [vmem:[%s849 + $0x178] sm:$0xff]
        %v970 = vld [vmem:[%s849 + $0x180] sm:$0xff]
        %v971 = vld [vmem:[%s849 + $0x188] sm:$0xff]
        %v972 = vld [vmem:[%s849 + $0x190] sm:$0xff]
        %v973 = vld [vmem:[%s849 + $0x198] sm:$0xff]
        %v974 = vld [vmem:[%s849 + $0x1a0] sm:$0xff]
        %v975 = vld [vmem:[%s849 + $0x1a8] sm:$0xff]
        %v976 = vld [vmem:[%s849 + $0x1b0] sm:$0xff]
        %v977 = vld [vmem:[%s849 + $0x1b8] sm:$0xff]
        %v978 = vld [vmem:[%s849 + $0x1c0] sm:$0xff]
        %v979 = vld [vmem:[%s849 + $0x1c8] sm:$0xff]
        %v980 = vld [vmem:[%s849 + $0x1d0] sm:$0xff]
        %v981 = vld [vmem:[%s849 + $0x1d8] sm:$0xff]
        %v982 = vld [vmem:[%s849 + $0x1e0] sm:$0xff]
        %v983 = vld [vmem:[%s849 + $0x1e8] sm:$0xff]
        %v984 = vld [vmem:[%s849 + $0x1f0] sm:$0xff]
        %v985 = vld [vmem:[%s849 + $0x1f8] sm:$0xff]
        %v986 = vld [vmem:[%s849 + $0x200] sm:$0xff]
        %v987 = vld [vmem:[%s849 + $0x208] sm:$0xff]
        %v988 = vld [vmem:[%s849 + $0x210] sm:$0xff]
        %v989 = vld [vmem:[%s849 + $0x218] sm:$0xff]
        %v990 = vld [vmem:[%s849 + $0x220] sm:$0xff]
        %v991 = vld [vmem:[%s849 + $0x228] sm:$0xff]
        %v992 = vld [vmem:[%s849 + $0x230] sm:$0xff]
        %v993 = vld [vmem:[%s849 + $0x238] sm:$0xff]
        %v994 = vld [vmem:[%s849 + $0x240] sm:$0xff]
        %v995 = vld [vmem:[%s849 + $0x248] sm:$0xff]
        %v996 = vld [vmem:[%s849 + $0x250] sm:$0xff]
        %v997 = vld [vmem:[%s849 + $0x258] sm:$0xff]
        %v998 = vld [vmem:[%s849 + $0x260] sm:$0xff]
        %v999 = vld [vmem:[%s849 + $0x268] sm:$0xff]
        %v1000 = vld [vmem:[%s849 + $0x270] sm:$0xff]
        %v1001 = vld [vmem:[%s849 + $0x278] sm:$0xff]
        %v1002 = vld [vmem:[%s849 + $0x280] sm:$0xff]
        %v1003 = vld [vmem:[%s849 + $0x288] sm:$0xff]
        %v1004 = vld [vmem:[%s849 + $0x290] sm:$0xff]
        %v1005 = vld [vmem:[%s849 + $0x298] sm:$0xff]
        %v1006 = vld [vmem:[%s849 + $0x2a0] sm:$0xff]
        %v1007 = vld [vmem:[%s849 + $0x2a8] sm:$0xff]
        %v1008 = vld [vmem:[%s849 + $0x2b0] sm:$0xff]
        %v1009 = vld [vmem:[%s849 + $0x2b8] sm:$0xff]
        %v1010 = vld [vmem:[%s849 + $0x2c0] sm:$0xff]
        %v1011 = vld [vmem:[%s849 + $0x2c8] sm:$0xff]
        %v1012 = vld [vmem:[%s849 + $0x2d0] sm:$0xff]
        %v1013 = vld [vmem:[%s849 + $0x2d8] sm:$0xff]
        %v1014 = vld [vmem:[%s849 + $0x2e0] sm:$0xff]
        %v1015 = vld [vmem:[%s849 + $0x2e8] sm:$0xff]
        %v1016 = vld [vmem:[%s849 + $0x2f0] sm:$0xff]
        %v1017 = vld [vmem:[%s849 + $0x2f8] sm:$0xff]
        %v1018 = vld [vmem:[%s849 + $0x300] sm:$0xff]
        %v1019 = vld [vmem:[%s849 + $0x308] sm:$0xff]
        %v1020 = vld [vmem:[%s849 + $0x310] sm:$0xff]
        %v1021 = vld [vmem:[%s849 + $0x318] sm:$0xff]
        %v1022 = vld [vmem:[%s849 + $0x320] sm:$0xff]
        %v1023 = vld [vmem:[%s849 + $0x328] sm:$0xff]
        %v1024 = vld [vmem:[%s849 + $0x330] sm:$0xff]
        %v1025 = vld [vmem:[%s849 + $0x338] sm:$0xff]
        %v1026 = vld [vmem:[%s849 + $0x340] sm:$0xff]
        %v1027 = vld [vmem:[%s849 + $0x348] sm:$0xff]
        %v1028 = vld [vmem:[%s849 + $0x350] sm:$0xff]
        %v1029 = vld [vmem:[%s849 + $0x358] sm:$0xff]
        %v1030 = vld [vmem:[%s849 + $0x360] sm:$0xff]
        %v1031 = vld [vmem:[%s849 + $0x368] sm:$0xff]
        %v1032 = vld [vmem:[%s849 + $0x370] sm:$0xff]
        %v1033 = vld [vmem:[%s849 + $0x378] sm:$0xff]
        %v1034 = vld [vmem:[%s849 + $0x380] sm:$0xff]
        %v1035 = vld [vmem:[%s849 + $0x388] sm:$0xff]
        %v1036 = vld [vmem:[%s849 + $0x390] sm:$0xff]
        %v1037 = vld [vmem:[%s849 + $0x398] sm:$0xff]
        %v1038 = vld [vmem:[%s849 + $0x3a0] sm:$0xff]
        %v1039 = vld [vmem:[%s849 + $0x3a8] sm:$0xff]
        %v1040 = vld [vmem:[%s849 + $0x3b0] sm:$0xff]
        %v1041 = vld [vmem:[%s849 + $0x3b8] sm:$0xff]
        %v1042 = vld [vmem:[%s849 + $0x3c0] sm:$0xff]
        %v1043 = vld [vmem:[%s849 + $0x3c8] sm:$0xff]
        %v1044 = vld [vmem:[%s849 + $0x3d0] sm:$0xff]
        %v1045 = vld [vmem:[%s849 + $0x3d8] sm:$0xff]
        %v1046 = vld [vmem:[%s849 + $0x3e0] sm:$0xff]
        %v1047 = vld [vmem:[%s849 + $0x3e8] sm:$0xff]
        %v1048 = vld [vmem:[%s849 + $0x3f0] sm:$0xff]
        %v1049 = vld [vmem:[%s849 + $0x3f8] sm:$0xff]
        %1050 = vmatprep.subr.mxu0 0.0
        %1051 = vmatpush1.msra.mxu0 %v922
        %1052 = vmatprep.subr.mxu0 0.0
        %1053 = vmatpush1.msra.mxu0 %v923
        %1054 = vmatprep.subr.mxu0 0.0
        %1055 = vmatpush1.msra.mxu0 %v924
        %1056 = vmatprep.subr.mxu0 0.0
        %1057 = vmatpush1.msra.mxu0 %v925
        %1058 = vmatprep.subr.mxu0 0.0
        %1059 = vmatpush1.msra.mxu0 %v926
        %1060 = vmatprep.subr.mxu0 0.0
        %1061 = vmatpush1.msra.mxu0 %v927
        %1062 = vmatprep.subr.mxu0 0.0
        %1063 = vmatpush1.msra.mxu0 %v928
        %1064 = vmatprep.subr.mxu0 0.0
        %1065 = vmatpush1.msra.mxu0 %v929
        %1066 = vmatprep.subr.mxu0 0.0
        %1067 = vmatpush1.msra.mxu0 %v930
        %1068 = vmatprep.subr.mxu0 0.0
        %1069 = vmatpush1.msra.mxu0 %v931
        %1070 = vmatprep.subr.mxu0 0.0
        %1071 = vmatpush1.msra.mxu0 %v932
        %1072 = vmatprep.subr.mxu0 0.0
        %1073 = vmatpush1.msra.mxu0 %v933
        %1074 = vmatprep.subr.mxu0 0.0
        %1075 = vmatpush1.msra.mxu0 %v934
        %1076 = vmatprep.subr.mxu0 0.0
        %1077 = vmatpush1.msra.mxu0 %v935
        %1078 = vmatprep.subr.mxu0 0.0
        %1079 = vmatpush1.msra.mxu0 %v936
        %1080 = vmatprep.subr.mxu0 0.0
        %1081 = vmatpush1.msra.mxu0 %v937
        %1082 = vmatprep.subr.mxu0 0.0
        %1083 = vmatpush1.msra.mxu0 0.0
        %1084 = vmatprep.subr.mxu0 0.0
        %1085 = vmatpush1.msra.mxu0 0.0
        %1086 = vmatprep.subr.mxu0 0.0
        %1087 = vmatpush1.msra.mxu0 0.0
        %1088 = vmatprep.subr.mxu0 0.0
        %1089 = vmatpush1.msra.mxu0 0.0
        %1090 = vmatprep.subr.mxu0 0.0
        %1091 = vmatpush1.msra.mxu0 0.0
        %1092 = vmatprep.subr.mxu0 0.0
        %1093 = vmatpush1.msra.mxu0 0.0
        %1094 = vmatprep.subr.mxu0 0.0
        %1095 = vmatpush1.msra.mxu0 0.0
        %1096 = vmatprep.subr.mxu0 0.0
        %1097 = vmatpush1.msra.mxu0 0.0
        %1098 = vmatprep.subr.mxu0 0.0
        %1099 = vmatpush1.msra.mxu0 0.0
        %1100 = vmatprep.subr.mxu0 0.0
        %1101 = vmatpush1.msra.mxu0 0.0
        %1102 = vmatprep.subr.mxu0 0.0
        %1103 = vmatpush1.msra.mxu0 0.0
        %1104 = vmatprep.subr.mxu0 0.0
        %1105 = vmatpush1.msra.mxu0 0.0
        %1106 = vmatprep.subr.mxu0 0.0
        %1107 = vmatpush1.msra.mxu0 0.0
        %1108 = vmatprep.subr.mxu0 0.0
        %1109 = vmatpush1.msra.mxu0 0.0
        %1110 = vmatprep.subr.mxu0 0.0
        %1111 = vmatpush1.msra.mxu0 0.0
        %1112 = vmatprep.subr.mxu0 0.0
        %1113 = vmatpush1.msra.mxu0 0.0
        %1114 = vmatprep.mubr.f32.mxu0 0.0
        %1115 = vmatmul.mubr.f32.gmra.mrb[0].mxu0 %v914
        %v1116 = vpop.f32.mrb[0].mxu0
        %v1117 = vadd.f32 0.0, %v1116
        %v1118 = vpop.f32.mrb[0].mxu0
        %1119 = vdwg.mxu0
        %1120 = vmatprep.subr.mxu0 0.0
        %1121 = vmatpush1.msra.mxu0 %v938
        %1122 = vmatprep.subr.mxu0 0.0
        %1123 = vmatpush1.msra.mxu0 %v939
        %1124 = vmatprep.subr.mxu0 0.0
        %1125 = vmatpush1.msra.mxu0 %v940
        %1126 = vmatprep.subr.mxu0 0.0
        %1127 = vmatpush1.msra.mxu0 %v941
        %1128 = vmatprep.subr.mxu0 0.0
        %1129 = vmatpush1.msra.mxu0 %v942
        %1130 = vmatprep.subr.mxu0 0.0
        %1131 = vmatpush1.msra.mxu0 %v943
        %1132 = vmatprep.subr.mxu0 0.0
        %1133 = vmatpush1.msra.mxu0 %v944
        %1134 = vmatprep.subr.mxu0 0.0
        %1135 = vmatpush1.msra.mxu0 %v945
        %1136 = vmatprep.subr.mxu0 0.0
        %1137 = vmatpush1.msra.mxu0 %v946
        %1138 = vmatprep.subr.mxu0 0.0
        %1139 = vmatpush1.msra.mxu0 %v947
        %1140 = vmatprep.subr.mxu0 0.0
        %1141 = vmatpush1.msra.mxu0 %v948
        %1142 = vmatprep.subr.mxu0 0.0
        %1143 = vmatpush1.msra.mxu0 %v949
        %1144 = vmatprep.subr.mxu0 0.0
        %1145 = vmatpush1.msra.mxu0 %v950
        %1146 = vmatprep.subr.mxu0 0.0
        %1147 = vmatpush1.msra.mxu0 %v951
        %1148 = vmatprep.subr.mxu0 0.0
        %1149 = vmatpush1.msra.mxu0 %v952
        %1150 = vmatprep.subr.mxu0 0.0
        %1151 = vmatpush1.msra.mxu0 %v953
        %1152 = vmatprep.subr.mxu0 0.0
        %1153 = vmatpush1.msra.mxu0 0.0
        %1154 = vmatprep.subr.mxu0 0.0
        %1155 = vmatpush1.msra.mxu0 0.0
        %1156 = vmatprep.subr.mxu0 0.0
        %1157 = vmatpush1.msra.mxu0 0.0
        %1158 = vmatprep.subr.mxu0 0.0
        %1159 = vmatpush1.msra.mxu0 0.0
        %1160 = vmatprep.subr.mxu0 0.0
        %1161 = vmatpush1.msra.mxu0 0.0
        %1162 = vmatprep.subr.mxu0 0.0
        %1163 = vmatpush1.msra.mxu0 0.0
        %1164 = vmatprep.subr.mxu0 0.0
        %1165 = vmatpush1.msra.mxu0 0.0
        %1166 = vmatprep.subr.mxu0 0.0
        %1167 = vmatpush1.msra.mxu0 0.0
        %1168 = vmatprep.subr.mxu0 0.0
        %1169 = vmatpush1.msra.mxu0 0.0
        %1170 = vmatprep.subr.mxu0 0.0
        %1171 = vmatpush1.msra.mxu0 0.0
        %1172 = vmatprep.subr.mxu0 0.0
        %1173 = vmatpush1.msra.mxu0 0.0
        %1174 = vmatprep.subr.mxu0 0.0
        %1175 = vmatpush1.msra.mxu0 0.0
        %1176 = vmatprep.subr.mxu0 0.0
        %1177 = vmatpush1.msra.mxu0 0.0
        %1178 = vmatprep.subr.mxu0 0.0
        %1179 = vmatpush1.msra.mxu0 0.0
        %1180 = vmatprep.subr.mxu0 0.0
        %1181 = vmatpush1.msra.mxu0 0.0
        %1182 = vmatprep.subr.mxu0 0.0
        %1183 = vmatpush1.msra.mxu0 0.0
        %1184 = vmatprep.mubr.f32.mxu0 0.0
        %1185 = vmatmul.mubr.f32.gmra.mrb[0].mxu0 %v915
        %v1186 = vpop.f32.mrb[0].mxu0
        %v1187 = vadd.f32 0.0, %v1186
        %v1188 = vpop.f32.mrb[0].mxu0
        %1189 = vdwg.mxu0
        %1190 = vmatprep.subr.mxu0 0.0
        %1191 = vmatpush1.msra.mxu0 %v954
        %1192 = vmatprep.subr.mxu0 0.0
        %1193 = vmatpush1.msra.mxu0 %v955
        %1194 = vmatprep.subr.mxu0 0.0
        %1195 = vmatpush1.msra.mxu0 %v956
        %1196 = vmatprep.subr.mxu0 0.0
        %1197 = vmatpush1.msra.mxu0 %v957
        %1198 = vmatprep.subr.mxu0 0.0
        %1199 = vmatpush1.msra.mxu0 %v958
        %1200 = vmatprep.subr.mxu0 0.0
        %1201 = vmatpush1.msra.mxu0 %v959
        %1202 = vmatprep.subr.mxu0 0.0
        %1203 = vmatpush1.msra.mxu0 %v960
        %1204 = vmatprep.subr.mxu0 0.0
        %1205 = vmatpush1.msra.mxu0 %v961
        %1206 = vmatprep.subr.mxu0 0.0
        %1207 = vmatpush1.msra.mxu0 %v962
        %1208 = vmatprep.subr.mxu0 0.0
        %1209 = vmatpush1.msra.mxu0 %v963
        %1210 = vmatprep.subr.mxu0 0.0
        %1211 = vmatpush1.msra.mxu0 %v964
        %1212 = vmatprep.subr.mxu0 0.0
        %1213 = vmatpush1.msra.mxu0 %v965
        %1214 = vmatprep.subr.mxu0 0.0
        %1215 = vmatpush1.msra.mxu0 %v966
        %1216 = vmatprep.subr.mxu0 0.0
        %1217 = vmatpush1.msra.mxu0 %v967
        %1218 = vmatprep.subr.mxu0 0.0
        %1219 = vmatpush1.msra.mxu0 %v968
        %1220 = vmatprep.subr.mxu0 0.0
        %1221 = vmatpush1.msra.mxu0 %v969
        %1222 = vmatprep.subr.mxu0 0.0
        %1223 = vmatpush1.msra.mxu0 0.0
        %1224 = vmatprep.subr.mxu0 0.0
        %1225 = vmatpush1.msra.mxu0 0.0
        %1226 = vmatprep.subr.mxu0 0.0
        %1227 = vmatpush1.msra.mxu0 0.0
        %1228 = vmatprep.subr.mxu0 0.0
        %1229 = vmatpush1.msra.mxu0 0.0
        %1230 = vmatprep.subr.mxu0 0.0
        %1231 = vmatpush1.msra.mxu0 0.0
        %1232 = vmatprep.subr.mxu0 0.0
        %1233 = vmatpush1.msra.mxu0 0.0
        %1234 = vmatprep.subr.mxu0 0.0
        %1235 = vmatpush1.msra.mxu0 0.0
        %1236 = vmatprep.subr.mxu0 0.0
        %1237 = vmatpush1.msra.mxu0 0.0
        %1238 = vmatprep.subr.mxu0 0.0
        %1239 = vmatpush1.msra.mxu0 0.0
        %1240 = vmatprep.subr.mxu0 0.0
        %1241 = vmatpush1.msra.mxu0 0.0
        %1242 = vmatprep.subr.mxu0 0.0
        %1243 = vmatpush1.msra.mxu0 0.0
        %1244 = vmatprep.subr.mxu0 0.0
        %1245 = vmatpush1.msra.mxu0 0.0
        %1246 = vmatprep.subr.mxu0 0.0
        %1247 = vmatpush1.msra.mxu0 0.0
        %1248 = vmatprep.subr.mxu0 0.0
        %1249 = vmatpush1.msra.mxu0 0.0
        %1250 = vmatprep.subr.mxu0 0.0
        %1251 = vmatpush1.msra.mxu0 0.0
        %1252 = vmatprep.subr.mxu0 0.0
        %1253 = vmatpush1.msra.mxu0 0.0
        %1254 = vmatprep.mubr.f32.mxu0 0.0
        %1255 = vmatmul.mubr.f32.gmra.mrb[0].mxu0 %v916
        %v1256 = vpop.f32.mrb[0].mxu0
        %v1257 = vadd.f32 0.0, %v1256
        %v1258 = vpop.f32.mrb[0].mxu0
        %1259 = vdwg.mxu0
        %1260 = vmatprep.subr.mxu0 0.0
        %1261 = vmatpush1.msra.mxu0 %v970
        %1262 = vmatprep.subr.mxu0 0.0
        %1263 = vmatpush1.msra.mxu0 %v971
        %1264 = vmatprep.subr.mxu0 0.0
        %1265 = vmatpush1.msra.mxu0 %v972
        %1266 = vmatprep.subr.mxu0 0.0
        %1267 = vmatpush1.msra.mxu0 %v973
        %1268 = vmatprep.subr.mxu0 0.0
        %1269 = vmatpush1.msra.mxu0 %v974
        %1270 = vmatprep.subr.mxu0 0.0
        %1271 = vmatpush1.msra.mxu0 %v975
        %1272 = vmatprep.subr.mxu0 0.0
        %1273 = vmatpush1.msra.mxu0 %v976
        %1274 = vmatprep.subr.mxu0 0.0
        %1275 = vmatpush1.msra.mxu0 %v977
        %1276 = vmatprep.subr.mxu0 0.0
        %1277 = vmatpush1.msra.mxu0 %v978
        %1278 = vmatprep.subr.mxu0 0.0
        %1279 = vmatpush1.msra.mxu0 %v979
        %1280 = vmatprep.subr.mxu0 0.0
        %1281 = vmatpush1.msra.mxu0 %v980
        %1282 = vmatprep.subr.mxu0 0.0
        %1283 = vmatpush1.msra.mxu0 %v981
        %1284 = vmatprep.subr.mxu0 0.0
        %1285 = vmatpush1.msra.mxu0 %v982
        %1286 = vmatprep.subr.mxu0 0.0
        %1287 = vmatpush1.msra.mxu0 %v983
        %1288 = vmatprep.subr.mxu0 0.0
        %1289 = vmatpush1.msra.mxu0 %v984
        %1290 = vmatprep.subr.mxu0 0.0
        %1291 = vmatpush1.msra.mxu0 %v985
        %1292 = vmatprep.subr.mxu0 0.0
        %1293 = vmatpush1.msra.mxu0 0.0
        %1294 = vmatprep.subr.mxu0 0.0
        %1295 = vmatpush1.msra.mxu0 0.0
        %1296 = vmatprep.subr.mxu0 0.0
        %1297 = vmatpush1.msra.mxu0 0.0
        %1298 = vmatprep.subr.mxu0 0.0
        %1299 = vmatpush1.msra.mxu0 0.0
        %1300 = vmatprep.subr.mxu0 0.0
        %1301 = vmatpush1.msra.mxu0 0.0
        %1302 = vmatprep.subr.mxu0 0.0
        %1303 = vmatpush1.msra.mxu0 0.0
        %1304 = vmatprep.subr.mxu0 0.0
        %1305 = vmatpush1.msra.mxu0 0.0
        %1306 = vmatprep.subr.mxu0 0.0
        %1307 = vmatpush1.msra.mxu0 0.0
        %1308 = vmatprep.subr.mxu0 0.0
        %1309 = vmatpush1.msra.mxu0 0.0
        %1310 = vmatprep.subr.mxu0 0.0
        %1311 = vmatpush1.msra.mxu0 0.0
        %1312 = vmatprep.subr.mxu0 0.0
        %1313 = vmatpush1.msra.mxu0 0.0
        %1314 = vmatprep.subr.mxu0 0.0
        %1315 = vmatpush1.msra.mxu0 0.0
        %1316 = vmatprep.subr.mxu0 0.0
        %1317 = vmatpush1.msra.mxu0 0.0
        %1318 = vmatprep.subr.mxu0 0.0
        %1319 = vmatpush1.msra.mxu0 0.0
        %1320 = vmatprep.subr.mxu0 0.0
        %1321 = vmatpush1.msra.mxu0 0.0
        %1322 = vmatprep.subr.mxu0 0.0
        %1323 = vmatpush1.msra.mxu0 0.0
        %1324 = vmatprep.mubr.f32.mxu0 0.0
        %1325 = vmatmul.mubr.f32.gmra.mrb[0].mxu0 %v917
        %v1326 = vpop.f32.mrb[0].mxu0
        %v1327 = vadd.f32 0.0, %v1326
        %v1328 = vpop.f32.mrb[0].mxu0
        %1329 = vdwg.mxu0
        %1330 = vmatprep.subr.mxu0 0.0
        %1331 = vmatpush1.msra.mxu0 %v986
        %1332 = vmatprep.subr.mxu0 0.0
        %1333 = vmatpush1.msra.mxu0 %v987
        %1334 = vmatprep.subr.mxu0 0.0
        %1335 = vmatpush1.msra.mxu0 %v988
        %1336 = vmatprep.subr.mxu0 0.0
        %1337 = vmatpush1.msra.mxu0 %v989
        %1338 = vmatprep.subr.mxu0 0.0
        %1339 = vmatpush1.msra.mxu0 %v990
        %1340 = vmatprep.subr.mxu0 0.0
        %1341 = vmatpush1.msra.mxu0 %v991
        %1342 = vmatprep.subr.mxu0 0.0
        %1343 = vmatpush1.msra.mxu0 %v992
        %1344 = vmatprep.subr.mxu0 0.0
        %1345 = vmatpush1.msra.mxu0 %v993
        %1346 = vmatprep.subr.mxu0 0.0
        %1347 = vmatpush1.msra.mxu0 %v994
        %1348 = vmatprep.subr.mxu0 0.0
        %1349 = vmatpush1.msra.mxu0 %v995
        %1350 = vmatprep.subr.mxu0 0.0
        %1351 = vmatpush1.msra.mxu0 %v996
        %1352 = vmatprep.subr.mxu0 0.0
        %1353 = vmatpush1.msra.mxu0 %v997
        %1354 = vmatprep.subr.mxu0 0.0
        %1355 = vmatpush1.msra.mxu0 %v998
        %1356 = vmatprep.subr.mxu0 0.0
        %1357 = vmatpush1.msra.mxu0 %v999
        %1358 = vmatprep.subr.mxu0 0.0
        %1359 = vmatpush1.msra.mxu0 %v1000
        %1360 = vmatprep.subr.mxu0 0.0
        %1361 = vmatpush1.msra.mxu0 %v1001
        %1362 = vmatprep.subr.mxu0 0.0
        %1363 = vmatpush1.msra.mxu0 0.0
        %1364 = vmatprep.subr.mxu0 0.0
        %1365 = vmatpush1.msra.mxu0 0.0
        %1366 = vmatprep.subr.mxu0 0.0
        %1367 = vmatpush1.msra.mxu0 0.0
        %1368 = vmatprep.subr.mxu0 0.0
        %1369 = vmatpush1.msra.mxu0 0.0
        %1370 = vmatprep.subr.mxu0 0.0
        %1371 = vmatpush1.msra.mxu0 0.0
        %1372 = vmatprep.subr.mxu0 0.0
        %1373 = vmatpush1.msra.mxu0 0.0
        %1374 = vmatprep.subr.mxu0 0.0
        %1375 = vmatpush1.msra.mxu0 0.0
        %1376 = vmatprep.subr.mxu0 0.0
        %1377 = vmatpush1.msra.mxu0 0.0
        %1378 = vmatprep.subr.mxu0 0.0
        %1379 = vmatpush1.msra.mxu0 0.0
        %1380 = vmatprep.subr.mxu0 0.0
        %1381 = vmatpush1.msra.mxu0 0.0
        %1382 = vmatprep.subr.mxu0 0.0
        %1383 = vmatpush1.msra.mxu0 0.0
        %1384 = vmatprep.subr.mxu0 0.0
        %1385 = vmatpush1.msra.mxu0 0.0
        %1386 = vmatprep.subr.mxu0 0.0
        %1387 = vmatpush1.msra.mxu0 0.0
        %1388 = vmatprep.subr.mxu0 0.0
        %1389 = vmatpush1.msra.mxu0 0.0
        %1390 = vmatprep.subr.mxu0 0.0
        %1391 = vmatpush1.msra.mxu0 0.0
        %1392 = vmatprep.subr.mxu0 0.0
        %1393 = vmatpush1.msra.mxu0 0.0
        %1394 = vmatprep.mubr.f32.mxu0 0.0
        %1395 = vmatmul.mubr.f32.gmra.mrb[0].mxu0 %v918
        %v1396 = vpop.f32.mrb[0].mxu0
        %v1397 = vadd.f32 0.0, %v1396
        %v1398 = vpop.f32.mrb[0].mxu0
        %1399 = vdwg.mxu0
        %1400 = vmatprep.subr.mxu0 0.0
        %1401 = vmatpush1.msra.mxu0 %v1002
        %1402 = vmatprep.subr.mxu0 0.0
        %1403 = vmatpush1.msra.mxu0 %v1003
        %1404 = vmatprep.subr.mxu0 0.0
        %1405 = vmatpush1.msra.mxu0 %v1004
        %1406 = vmatprep.subr.mxu0 0.0
        %1407 = vmatpush1.msra.mxu0 %v1005
        %1408 = vmatprep.subr.mxu0 0.0
        %1409 = vmatpush1.msra.mxu0 %v1006
        %1410 = vmatprep.subr.mxu0 0.0
        %1411 = vmatpush1.msra.mxu0 %v1007
        %1412 = vmatprep.subr.mxu0 0.0
        %1413 = vmatpush1.msra.mxu0 %v1008
        %1414 = vmatprep.subr.mxu0 0.0
        %1415 = vmatpush1.msra.mxu0 %v1009
        %1416 = vmatprep.subr.mxu0 0.0
        %1417 = vmatpush1.msra.mxu0 %v1010
        %1418 = vmatprep.subr.mxu0 0.0
        %1419 = vmatpush1.msra.mxu0 %v1011
        %1420 = vmatprep.subr.mxu0 0.0
        %1421 = vmatpush1.msra.mxu0 %v1012
        %1422 = vmatprep.subr.mxu0 0.0
        %1423 = vmatpush1.msra.mxu0 %v1013
        %1424 = vmatprep.subr.mxu0 0.0
        %1425 = vmatpush1.msra.mxu0 %v1014
        %1426 = vmatprep.subr.mxu0 0.0
        %1427 = vmatpush1.msra.mxu0 %v1015
        %1428 = vmatprep.subr.mxu0 0.0
        %1429 = vmatpush1.msra.mxu0 %v1016
        %1430 = vmatprep.subr.mxu0 0.0
        %1431 = vmatpush1.msra.mxu0 %v1017
        %1432 = vmatprep.subr.mxu0 0.0
        %1433 = vmatpush1.msra.mxu0 0.0
        %1434 = vmatprep.subr.mxu0 0.0
        %1435 = vmatpush1.msra.mxu0 0.0
        %1436 = vmatprep.subr.mxu0 0.0
        %1437 = vmatpush1.msra.mxu0 0.0
        %1438 = vmatprep.subr.mxu0 0.0
        %1439 = vmatpush1.msra.mxu0 0.0
        %1440 = vmatprep.subr.mxu0 0.0
        %1441 = vmatpush1.msra.mxu0 0.0
        %1442 = vmatprep.subr.mxu0 0.0
        %1443 = vmatpush1.msra.mxu0 0.0
        %1444 = vmatprep.subr.mxu0 0.0
        %1445 = vmatpush1.msra.mxu0 0.0
        %1446 = vmatprep.subr.mxu0 0.0
        %1447 = vmatpush1.msra.mxu0 0.0
        %1448 = vmatprep.subr.mxu0 0.0
        %1449 = vmatpush1.msra.mxu0 0.0
        %1450 = vmatprep.subr.mxu0 0.0
        %1451 = vmatpush1.msra.mxu0 0.0
        %1452 = vmatprep.subr.mxu0 0.0
        %1453 = vmatpush1.msra.mxu0 0.0
        %1454 = vmatprep.subr.mxu0 0.0
        %1455 = vmatpush1.msra.mxu0 0.0
        %1456 = vmatprep.subr.mxu0 0.0
        %1457 = vmatpush1.msra.mxu0 0.0
        %1458 = vmatprep.subr.mxu0 0.0
        %1459 = vmatpush1.msra.mxu0 0.0
        %1460 = vmatprep.subr.mxu0 0.0
        %1461 = vmatpush1.msra.mxu0 0.0
        %1462 = vmatprep.subr.mxu0 0.0
        %1463 = vmatpush1.msra.mxu0 0.0
        %1464 = vmatprep.mubr.f32.mxu0 0.0
        %1465 = vmatmul.mubr.f32.gmra.mrb[0].mxu0 %v919
        %v1466 = vpop.f32.mrb[0].mxu0
        %v1467 = vadd.f32 0.0, %v1466
        %v1468 = vpop.f32.mrb[0].mxu0
        %1469 = vdwg.mxu0
        %1470 = vmatprep.subr.mxu0 0.0
        %1471 = vmatpush1.msra.mxu0 %v1018
        %1472 = vmatprep.subr.mxu0 0.0
        %1473 = vmatpush1.msra.mxu0 %v1019
        %1474 = vmatprep.subr.mxu0 0.0
        %1475 = vmatpush1.msra.mxu0 %v1020
        %1476 = vmatprep.subr.mxu0 0.0
        %1477 = vmatpush1.msra.mxu0 %v1021
        %1478 = vmatprep.subr.mxu0 0.0
        %1479 = vmatpush1.msra.mxu0 %v1022
        %1480 = vmatprep.subr.mxu0 0.0
        %1481 = vmatpush1.msra.mxu0 %v1023
        %1482 = vmatprep.subr.mxu0 0.0
        %1483 = vmatpush1.msra.mxu0 %v1024
        %1484 = vmatprep.subr.mxu0 0.0
        %1485 = vmatpush1.msra.mxu0 %v1025
        %1486 = vmatprep.subr.mxu0 0.0
        %1487 = vmatpush1.msra.mxu0 %v1026
        %1488 = vmatprep.subr.mxu0 0.0
        %1489 = vmatpush1.msra.mxu0 %v1027
        %1490 = vmatprep.subr.mxu0 0.0
        %1491 = vmatpush1.msra.mxu0 %v1028
        %1492 = vmatprep.subr.mxu0 0.0
        %1493 = vmatpush1.msra.mxu0 %v1029
        %1494 = vmatprep.subr.mxu0 0.0
        %1495 = vmatpush1.msra.mxu0 %v1030
        %1496 = vmatprep.subr.mxu0 0.0
        %1497 = vmatpush1.msra.mxu0 %v1031
        %1498 = vmatprep.subr.mxu0 0.0
        %1499 = vmatpush1.msra.mxu0 %v1032
        %1500 = vmatprep.subr.mxu0 0.0
        %1501 = vmatpush1.msra.mxu0 %v1033
        %1502 = vmatprep.subr.mxu0 0.0
        %1503 = vmatpush1.msra.mxu0 0.0
        %1504 = vmatprep.subr.mxu0 0.0
        %1505 = vmatpush1.msra.mxu0 0.0
        %1506 = vmatprep.subr.mxu0 0.0
        %1507 = vmatpush1.msra.mxu0 0.0
        %1508 = vmatprep.subr.mxu0 0.0
        %1509 = vmatpush1.msra.mxu0 0.0
        %1510 = vmatprep.subr.mxu0 0.0
        %1511 = vmatpush1.msra.mxu0 0.0
        %1512 = vmatprep.subr.mxu0 0.0
        %1513 = vmatpush1.msra.mxu0 0.0
        %1514 = vmatprep.subr.mxu0 0.0
        %1515 = vmatpush1.msra.mxu0 0.0
        %1516 = vmatprep.subr.mxu0 0.0
        %1517 = vmatpush1.msra.mxu0 0.0
        %1518 = vmatprep.subr.mxu0 0.0
        %1519 = vmatpush1.msra.mxu0 0.0
        %1520 = vmatprep.subr.mxu0 0.0
        %1521 = vmatpush1.msra.mxu0 0.0
        %1522 = vmatprep.subr.mxu0 0.0
        %1523 = vmatpush1.msra.mxu0 0.0
        %1524 = vmatprep.subr.mxu0 0.0
        %1525 = vmatpush1.msra.mxu0 0.0
        %1526 = vmatprep.subr.mxu0 0.0
        %1527 = vmatpush1.msra.mxu0 0.0
        %1528 = vmatprep.subr.mxu0 0.0
        %1529 = vmatpush1.msra.mxu0 0.0
        %1530 = vmatprep.subr.mxu0 0.0
        %1531 = vmatpush1.msra.mxu0 0.0
        %1532 = vmatprep.subr.mxu0 0.0
        %1533 = vmatpush1.msra.mxu0 0.0
        %1534 = vmatprep.mubr.f32.mxu0 0.0
        %1535 = vmatmul.mubr.f32.gmra.mrb[0].mxu0 %v920
        %v1536 = vpop.f32.mrb[0].mxu0
        %v1537 = vadd.f32 0.0, %v1536
        %v1538 = vpop.f32.mrb[0].mxu0
        %1539 = vdwg.mxu0
        %1540 = vmatprep.subr.mxu0 0.0
        %1541 = vmatpush1.msra.mxu0 %v1034
        %1542 = vmatprep.subr.mxu0 0.0
        %1543 = vmatpush1.msra.mxu0 %v1035
        %1544 = vmatprep.subr.mxu0 0.0
        %1545 = vmatpush1.msra.mxu0 %v1036
        %1546 = vmatprep.subr.mxu0 0.0
        %1547 = vmatpush1.msra.mxu0 %v1037
        %1548 = vmatprep.subr.mxu0 0.0
        %1549 = vmatpush1.msra.mxu0 %v1038
        %1550 = vmatprep.subr.mxu0 0.0
        %1551 = vmatpush1.msra.mxu0 %v1039
        %1552 = vmatprep.subr.mxu0 0.0
        %1553 = vmatpush1.msra.mxu0 %v1040
        %1554 = vmatprep.subr.mxu0 0.0
        %1555 = vmatpush1.msra.mxu0 %v1041
        %1556 = vmatprep.subr.mxu0 0.0
        %1557 = vmatpush1.msra.mxu0 %v1042
        %1558 = vmatprep.subr.mxu0 0.0
        %1559 = vmatpush1.msra.mxu0 %v1043
        %1560 = vmatprep.subr.mxu0 0.0
        %1561 = vmatpush1.msra.mxu0 %v1044
        %1562 = vmatprep.subr.mxu0 0.0
        %1563 = vmatpush1.msra.mxu0 %v1045
        %1564 = vmatprep.subr.mxu0 0.0
        %1565 = vmatpush1.msra.mxu0 %v1046
        %1566 = vmatprep.subr.mxu0 0.0
        %1567 = vmatpush1.msra.mxu0 %v1047
        %1568 = vmatprep.subr.mxu0 0.0
        %1569 = vmatpush1.msra.mxu0 %v1048
        %1570 = vmatprep.subr.mxu0 0.0
        %1571 = vmatpush1.msra.mxu0 %v1049
        %1572 = vmatprep.subr.mxu0 0.0
        %1573 = vmatpush1.msra.mxu0 0.0
        %1574 = vmatprep.subr.mxu0 0.0
        %1575 = vmatpush1.msra.mxu0 0.0
        %1576 = vmatprep.subr.mxu0 0.0
        %1577 = vmatpush1.msra.mxu0 0.0
        %1578 = vmatprep.subr.mxu0 0.0
        %1579 = vmatpush1.msra.mxu0 0.0
        %1580 = vmatprep.subr.mxu0 0.0
        %1581 = vmatpush1.msra.mxu0 0.0
        %1582 = vmatprep.subr.mxu0 0.0
        %1583 = vmatpush1.msra.mxu0 0.0
        %1584 = vmatprep.subr.mxu0 0.0
        %1585 = vmatpush1.msra.mxu0 0.0
        %1586 = vmatprep.subr.mxu0 0.0
        %1587 = vmatpush1.msra.mxu0 0.0
        %1588 = vmatprep.subr.mxu0 0.0
        %1589 = vmatpush1.msra.mxu0 0.0
        %1590 = vmatprep.subr.mxu0 0.0
        %1591 = vmatpush1.msra.mxu0 0.0
        %1592 = vmatprep.subr.mxu0 0.0
        %1593 = vmatpush1.msra.mxu0 0.0
        %1594 = vmatprep.subr.mxu0 0.0
        %1595 = vmatpush1.msra.mxu0 0.0
        %1596 = vmatprep.subr.mxu0 0.0
        %1597 = vmatpush1.msra.mxu0 0.0
        %1598 = vmatprep.subr.mxu0 0.0
        %1599 = vmatpush1.msra.mxu0 0.0
        %1600 = vmatprep.subr.mxu0 0.0
        %1601 = vmatpush1.msra.mxu0 0.0
        %1602 = vmatprep.subr.mxu0 0.0
        %1603 = vmatpush1.msra.mxu0 0.0
        %1604 = vmatprep.mubr.f32.mxu0 0.0
        %1605 = vmatmul.mubr.f32.gmra.mrb[0].mxu0 %v921
        %v1606 = vpop.f32.mrb[0].mxu0
        %v1607 = vadd.f32 0.0, %v1606
        %v1608 = vpop.f32.mrb[0].mxu0
        %1609 = vdwg.mxu0
        %v1610 = vadd.f32 %v906, %v1117
        %v1611 = vadd.f32 %v907, %v1187
        %v1612 = vadd.f32 %v908, %v1257
        %v1613 = vadd.f32 %v909, %v1327
        %v1614 = vadd.f32 %v910, %v1397
        %v1615 = vadd.f32 %v911, %v1467
        %v1616 = vadd.f32 %v912, %v1537
        %v1617 = vadd.f32 %v913, %v1607
        %vm1618 = vcmask 516096
        %1619 = vst.msk [vmem:[#allocation2] sm:$0x1] %vm1618, %v1610
        %1620 = vst.msk [vmem:[#allocation2 + $0x1] sm:$0x1] %vm1618, %v1611
        %1621 = vst.msk [vmem:[#allocation2 + $0x2] sm:$0x1] %vm1618, %v1612
        %1622 = vst.msk [vmem:[#allocation2 + $0x3] sm:$0x1] %vm1618, %v1613
        %1623 = vst.msk [vmem:[#allocation2 + $0x4] sm:$0x1] %vm1618, %v1614
        %1624 = vst.msk [vmem:[#allocation2 + $0x5] sm:$0x1] %vm1618, %v1615
        %1625 = vst.msk [vmem:[#allocation2 + $0x6] sm:$0x1] %vm1618, %v1616
        %1626 = vst.msk [vmem:[#allocation2 + $0x7] sm:$0x1] %vm1618, %v1617
        %p1627 = scmp.eq.s32.totalorder %s25, 1
        // Predicated region
        $region124: #{tpu_custom_call.1} parent=110 // pred_check
          %p1628 = pneg %p1627
        $region125: #{tpu_custom_call.1} parent=110 // pred_check_branch
          %1630 = sbr.rel (%p1628) target = $region127
        $region126: #{tpu_custom_call.1} parent=110 // pred_region
          %v1631 = vld [vmem:[#allocation2] sm:$0x1]
          %v1632 = vld [vmem:[#allocation2 + $0x1] sm:$0x1]
          %v1633 = vld [vmem:[#allocation2 + $0x2] sm:$0x1]
          %v1634 = vld [vmem:[#allocation2 + $0x3] sm:$0x1]
          %v1635 = vld [vmem:[#allocation2 + $0x4] sm:$0x1]
          %v1636 = vld [vmem:[#allocation2 + $0x5] sm:$0x1]
          %v1637 = vld [vmem:[#allocation2 + $0x6] sm:$0x1]
          %v1638 = vld [vmem:[#allocation2 + $0x7] sm:$0x1]
          %v1639 = vld [vmem:[%s3] sm:$0x1]
          %v1648 = vcombine.low %v1631, %v1632
          %v1649 = vcombine.low %v1633, %v1634
          %v1650 = vcombine.low %v1635, %v1636
          %v1651 = vcombine.low %v1637, %v1638
          %v1653 = vunpack.c.l.s4 1966171168
          %v1654 = vunpack.c.0.s8 %v1653
          %v1655 = vlaneseq
          %v1656 = vshrl.u32 %v1655, 7
          %v1657 = vsub.s32 %v1654, %v1656
          %v1658 = vrot.slane %v1648, %v1657
          %v1660 = vunpack.c.l.s4 1966171168
          %v1661 = vunpack.c.0.s8 %v1660
          %v1662 = vlaneseq
          %v1663 = vshrl.u32 %v1662, 7
          %v1664 = vsub.s32 %v1661, %v1663
          %v1665 = vrot.slane %v1649, %v1664
          %v1667 = vunpack.c.l.s4 1966171168
          %v1668 = vunpack.c.0.s8 %v1667
          %v1669 = vlaneseq
          %v1670 = vshrl.u32 %v1669, 7
          %v1671 = vsub.s32 %v1668, %v1670
          %v1672 = vrot.slane %v1650, %v1671
          %v1674 = vunpack.c.l.s4 1966171168
          %v1675 = vunpack.c.0.s8 %v1674
          %v1676 = vlaneseq
          %v1677 = vshrl.u32 %v1676, 7
          %v1678 = vsub.s32 %v1675, %v1677
          %v1679 = vrot.slane %v1651, %v1678
          %v1680 = vcombine.low %v1658, %v1665
          %v1681 = vcombine.low %v1672, %v1679
          %v1683 = vunpack.c.l.s4 1966171168
          %v1684 = vunpack.c.0.s8 %v1683
          %v1685 = vlaneseq
          %v1686 = vshrl.u32 %v1685, 7
          %v1687 = vsub.s32 %v1684, %v1686
          %v1688 = vrot.slane %v1680, %v1687
          %v1690 = vunpack.c.l.s4 1966171168
          %v1691 = vunpack.c.0.s8 %v1690
          %v1692 = vlaneseq
          %v1693 = vshrl.u32 %v1692, 7
          %v1694 = vsub.s32 %v1691, %v1693
          %v1695 = vrot.slane %v1681, %v1694
          %v1696 = vcombine.low %v1688, %v1695
          %vm1697 = vcmask 523264
          %v1699 = vsel %vm1697, %v1639, 0
          %v1701 = vsel %vm1697, %v1696, 0
          %1703 = vmatprep.subr.mxu0 0.0
          %1704 = vmatpush1.xpose.msra.mxu0 %v1701
          %1705 = vmatprep.subr.mxu0 0.0
          %1706 = vmatpush1.xpose.msra.mxu0 0.0
          %1707 = vmatprep.subr.mxu0 0.0
          %1708 = vmatpush1.xpose.msra.mxu0 0.0
          %1709 = vmatprep.subr.mxu0 0.0
          %1710 = vmatpush1.xpose.msra.mxu0 0.0
          %1711 = vmatprep.subr.mxu0 0.0
          %1712 = vmatpush1.xpose.msra.mxu0 0.0
          %1713 = vmatprep.subr.mxu0 0.0
          %1714 = vmatpush1.xpose.msra.mxu0 0.0
          %1715 = vmatprep.subr.mxu0 0.0
          %1716 = vmatpush1.xpose.msra.mxu0 0.0
          %1717 = vmatprep.subr.mxu0 0.0
          %1718 = vmatpush1.xpose.msra.mxu0 0.0
          %1719 = vmatprep.subr.mxu0 0.0
          %1720 = vmatpush1.xpose.msra.mxu0 0.0
          %1721 = vmatprep.subr.mxu0 0.0
          %1722 = vmatpush1.xpose.msra.mxu0 0.0
          %1723 = vmatprep.subr.mxu0 0.0
          %1724 = vmatpush1.xpose.msra.mxu0 0.0
          %1725 = vmatprep.subr.mxu0 0.0
          %1726 = vmatpush1.xpose.msra.mxu0 0.0
          %1727 = vmatprep.subr.mxu0 0.0
          %1728 = vmatpush1.xpose.msra.mxu0 0.0
          %1729 = vmatprep.subr.mxu0 0.0
          %1730 = vmatpush1.xpose.msra.mxu0 0.0
          %1731 = vmatprep.subr.mxu0 0.0
          %1732 = vmatpush1.xpose.msra.mxu0 0.0
          %1733 = vmatprep.subr.mxu0 0.0
          %1734 = vmatpush1.xpose.msra.mxu0 0.0
          %1735 = vmatprep.subr.mxu0 0.0
          %1736 = vmatpush1.xpose.msra.mxu0 0.0
          %1737 = vmatprep.subr.mxu0 0.0
          %1738 = vmatpush1.xpose.msra.mxu0 0.0
          %1739 = vmatprep.subr.mxu0 0.0
          %1740 = vmatpush1.xpose.msra.mxu0 0.0
          %1741 = vmatprep.subr.mxu0 0.0
          %1742 = vmatpush1.xpose.msra.mxu0 0.0
          %1743 = vmatprep.subr.mxu0 0.0
          %1744 = vmatpush1.xpose.msra.mxu0 0.0
          %1745 = vmatprep.subr.mxu0 0.0
          %1746 = vmatpush1.xpose.msra.mxu0 0.0
          %1747 = vmatprep.subr.mxu0 0.0
          %1748 = vmatpush1.xpose.msra.mxu0 0.0
          %1749 = vmatprep.subr.mxu0 0.0
          %1750 = vmatpush1.xpose.msra.mxu0 0.0
          %1751 = vmatprep.subr.mxu0 0.0
          %1752 = vmatpush1.xpose.msra.mxu0 0.0
          %1753 = vmatprep.subr.mxu0 0.0
          %1754 = vmatpush1.xpose.msra.mxu0 0.0
          %1755 = vmatprep.subr.mxu0 0.0
          %1756 = vmatpush1.xpose.msra.mxu0 0.0
          %1757 = vmatprep.subr.mxu0 0.0
          %1758 = vmatpush1.xpose.msra.mxu0 0.0
          %1759 = vmatprep.subr.mxu0 0.0
          %1760 = vmatpush1.xpose.msra.mxu0 0.0
          %1761 = vmatprep.subr.mxu0 0.0
          %1762 = vmatpush1.xpose.msra.mxu0 0.0
          %1763 = vmatprep.subr.mxu0 0.0
          %1764 = vmatpush1.xpose.msra.mxu0 0.0
          %1765 = vmatprep.subr.mxu0 0.0
          %1766 = vmatpush1.xpose.msra.mxu0 0.0
          %1767 = vmatprep.mubr.f32.mxu0 0.0
          %1768 = vmatmul.mubr.f32.gmra.mrb[0].mxu0 %v1699
          %v1769 = vpop.f32.mrb[0].mxu0
          %v1770 = vadd.f32 0.0, %v1769
          %v1771 = vpop.f32.mrb[0].mxu0
          %1772 = vdwg.mxu0
          %v1773 = vld [vmem:[%s892] sm:$0x1]
          %v1774 = vrcp.pop %v1773
          %v1775 = vmul.f32 %v1770, %v1774
          %s1776 = sld [smem:[#allocation3]]
          %v1777 = vstv %s1776
          %v1778 = vadd.f32 %v1775, %v1777
          %v1779 = vxor.u32 %v1778, 2147483648
          %v1780 = vmul.f32 %v1779, 1.442695
          %v1781 = vpow.pop %v1780
          %v1782 = vadd.f32 %v1781, 1.0
          %v1783 = vrcp.pop %v1782
          %v1784 = vmul.f32 1.0, %v1783
          %v1785 = vrcp.pop 0.5
          %v1786 = vmul.f32 %v1784, %v1785
          %vm1787 = vcmask 57344
          %1788 = vst.msk [vmem:[%s886] sm:$0x1] %vm1787, %v1786
        $region127: #{tpu_custom_call.1} parent=110 // pred_fallthru
          _
        %s1789 = sand.u32 %s164, 1
        %s1790 = scalar_lea.sflag [#allocation7], %s1789
        %s1791 = sand.u32 %s164, 1
        %s1792 = scalar_lea.vmem [#allocation6], %s1791
        // Predicated region
        $region128: #{tpu_custom_call.1} parent=110 // pred_check
          %p1793 = pneg %p174
        $region129: #{tpu_custom_call.1} parent=110 // pred_check_branch
          %1795 = sbr.rel (%p1793) target = $region131
        $region130: #{tpu_custom_call.1} parent=110 // pred_region
          %s1797 = ssub.s32 16, 16
          %1798 = vsyncadd %s1790, %s1797
          %s1799 = smul.addr %s24, 16
          %s1800 = scalar_lea.hbm %s5, %s1799
          %s1802 = sshll.u32 %s1792, 4
          %s1803 = int_to_ptr.vmem [resolvable:$true] %s1802
          %1805 = dma.vmem_to_hbm [thread:$0]  %s1803, 16, %s1800, %s1790
        $region131: #{tpu_custom_call.1} parent=110 // pred_fallthru
          _
      $region111: #{tpu_custom_call.1} parent=5 // pred_fallthru
        _
      %p1806 = scmp.le.s32.totalorder 2, %s15
      // Predicated region
      $region132: #{tpu_custom_call.1} parent=5 // pred_check
        %p1807 = pneg %p1806
      $region133: #{tpu_custom_call.1} parent=5 // pred_check_branch
        %1809 = sbr.rel (%p1807) target = $region135
      $region134: #{tpu_custom_call.1} parent=5 // pred_region
        %s1810 = ssub.s32 %s15, 2
        // Predicated region
        $region136: #{tpu_custom_call.1} parent=134 // pred_check
          %p1811 = pneg %p180
        $region137: #{tpu_custom_call.1} parent=134 // pred_check_branch
          %1813 = sbr.rel (%p1811) target = $region139
        $region138: #{tpu_custom_call.1} parent=134 // pred_region
          %s1814 = sand.u32 %s165, 1
          %s1815 = scalar_lea.sflag [#allocation7], %s1814
          %s1816 = sand.u32 %s165, 1
          %s1817 = scalar_lea.vmem [#allocation6], %s1816
          %1818 = dma.done %s1815, 16
        $region139: #{tpu_custom_call.1} parent=134 // pred_fallthru
          _
      $region135: #{tpu_custom_call.1} parent=5 // pred_fallthru
        _
    $region6: #{tpu_custom_call.1} parent=1 // loop_footer
      %s19 = sadd.s32 1, %s15
    $region7: #{tpu_custom_call.1} parent=1 // loop_footer_branch
      %14 = sbr.rel target = $region3
    $region8: #{tpu_custom_call.1} parent=1 // loop_exit
      _
    %1819 = vsyncpa [#allocation7], 1
    %s1820 = scalar_lea.sflag [#allocation7], 1
    %1821 = vsyncpa %s1820, 1

</llo_original>
